<compile_context>
chip_gen: v7x
topology: tpu7x:2x2x1
jax: 0.10.0
libtpu: 0.0.40
codegen_flags: <defaults>
</compile_context>

<pallas_src>
import functools

import jax
import jax.numpy as jnp
from jax import lax
from jax.experimental import pallas as pl
from jax.experimental.pallas import tpu as pltpu


# ----------------------------------------------------------------------------
# Fused ResnetBlock kernel: x block (batch_tile, C, H*W), weights (C, 9*C)
# ----------------------------------------------------------------------------
def _resnet_block_kernel(x_ref, w1_ref, w2_ref, o_ref, *, H, W, eps, mxu_dtype):
    B_tile, C, HW = x_ref.shape
    inv_hw = 1.0 / float(HW)

    # ---- hoisted replication-pad edge masks on the flattened HW lane axis ----
    p = lax.broadcasted_iota(jnp.int32, (C, HW), 1)      # flat spatial index
    col = p % W
    mask_h_first = p < W                                  # row h == 0
    mask_h_last = p >= HW - W                             # row h == H-1
    mask_w_first = col == 0                               # col w == 0
    mask_w_last = col == W - 1                            # col w == W-1

    def shift(a, dh, dw):
        """out[:, (h, w)] = a[:, clamp(h+dh), clamp(w+dw)]  (replication pad)."""
        # H shift (rows of W lanes): XLU roll + boundary-row fixup.
        if dh == -1:
            a = jnp.where(mask_h_first, a, pltpu.roll(a, shift=W, axis=1))
        elif dh == 1:
            a = jnp.where(mask_h_last, a, pltpu.roll(a, shift=HW - W, axis=1))
        # W shift (within each row): XLU roll + boundary-column fixup.
        if dw == -1:
            a = jnp.where(mask_w_first, a, pltpu.roll(a, shift=1, axis=1))
        elif dw == 1:
            a = jnp.where(mask_w_last, a, pltpu.roll(a, shift=HW - 1, axis=1))
        return a

    def conv3x3_replpad(inp, w_ref):
        """ReplicationPad2d(1) + Conv2d(C->C, 3x3): one (C,9C)@(9C,HW) matmul."""
        taps = [shift(inp, dh, dw) for dh in (-1, 0, 1) for dw in (-1, 0, 1)]
        patch = jnp.concatenate(taps, axis=0).astype(mxu_dtype)       # (9C, HW)
        return jnp.dot(w_ref[...], patch,
                       preferred_element_type=jnp.float32)            # (C, HW) f32

    def instance_norm(y):
        # InstanceNorm2d(affine=False): per-channel stats over H*W, biased var,
        # eps inside rsqrt (as PyTorch).  One pass: E[x^2] - mean^2.
        s = jnp.sum(y, axis=1, keepdims=True)                         # (C, 1)
        ss = jnp.sum(y * y, axis=1, keepdims=True)                    # (C, 1)
        mean = s * inv_hw
        var = ss * inv_hw - mean * mean
        return (y - mean) * lax.rsqrt(var + eps)

    for b in range(B_tile):                               # static, small tile
        x = x_ref[b]                                      # (C, HW) float32
        y = instance_norm(conv3x3_replpad(x, w1_ref))
        y = jnp.maximum(y, 0.0)                           # ReLU
        y = instance_norm(conv3x3_replpad(y, w2_ref))
        o_ref[b] = (x + y).astype(o_ref.dtype)            # residual add


# ----------------------------------------------------------------------------
# Wrapper: NCHW in/out (PyTorch-facing), (C, H*W) tiles inside the kernel
# ----------------------------------------------------------------------------
def resnet_block_forward(params, x_nchw, *, eps=1e-5, mxu_dtype=jnp.bfloat16,
                         batch_tile=1):
    """out = x + conv_block(x).  mxu_dtype=jnp.float32 for exact-f32 matmuls."""
    x = x_nchw.astype(jnp.float32)
    N, C, H, W = x.shape
    HW = H * W
    assert N % batch_tile == 0, (N, batch_tile)
    x = x.reshape(N, C, HW)                               # free reshape, no transpose

    # torch OIHW -> (O, KH, KW, I) -> (O, 9*I) so the 9 taps stacked along the
    # contraction dim line up with w[o, i, kh, kw] (tap (dh, dw) = (kh-1, kw-1)).
    def pack_weight(w):
        return jnp.transpose(w, (0, 2, 3, 1)).reshape(C, 9 * C).astype(mxu_dtype)

    w1 = pack_weight(params["w1"])
    w2 = pack_weight(params["w2"])
    # Conv biases b1/b2 are cancelled exactly by InstanceNorm2d(affine=False)
    # mean subtraction -> not passed to the kernel at all.

    kern = functools.partial(_resnet_block_kernel, H=H, W=W, eps=eps,
                             mxu_dtype=mxu_dtype)
    flops = 2 * (2 * N * HW * 9 * C * C)                  # two 3x3 convs (MACs*2)
    bytes_accessed = (4 * 2 * N * C * HW                  # activations in + out (f32)
                      + 2 * 2 * 9 * C * C)                # two bf16 weight mats

    out = pl.pallas_call(
        kern,
        out_shape=jax.ShapeDtypeStruct((N, C, HW), jnp.float32),
        grid_spec=pltpu.PrefetchScalarGridSpec(
            num_scalar_prefetch=0,
            grid=(N // batch_tile,),
            in_specs=[
                pl.BlockSpec((batch_tile, C, HW), lambda n: (n, 0, 0)),  # x
                pl.BlockSpec((C, 9 * C), lambda n: (0, 0)),              # w1 (resident)
                pl.BlockSpec((C, 9 * C), lambda n: (0, 0)),              # w2 (resident)
            ],
            out_specs=pl.BlockSpec((batch_tile, C, HW), lambda n: (n, 0, 0)),
        ),
        compiler_params=pltpu.CompilerParams(
            dimension_semantics=("parallel",),            # batch split across TCs (v7x)
            vmem_limit_bytes=32 * 1024 * 1024,
        ),
        cost_estimate=pl.CostEstimate(
            flops=flops, transcendentals=2 * N * C, bytes_accessed=bytes_accessed),
    )(x, w1, w2)
    return out.reshape(N, C, H, W)


# ----------------------------------------------------------------------------
# Parameters + pure-JAX reference (bias INCLUDED here to prove cancellation)
# ----------------------------------------------------------------------------
def make_params(key, n_features, *, bias=True):
    keys = jax.random.split(key, 4)
    std = float((9 * n_features) ** -0.5)
    w1 = std * jax.random.normal(keys[0], (n_features, n_features, 3, 3), jnp.float32)
    w2 = std * jax.random.normal(keys[1], (n_features, n_features, 3, 3), jnp.float32)
    if bias:
        b1 = 0.05 * jax.random.normal(keys[2], (n_features,), jnp.float32)
        b2 = 0.05 * jax.random.normal(keys[3], (n_features,), jnp.float32)
    else:
        b1 = jnp.zeros((n_features,), jnp.float32)
        b2 = jnp.zeros((n_features,), jnp.float32)
    return {"w1": w1, "b1": b1, "w2": w2, "b2": b2}


def resnet_block_reference(params, x_nchw, *, eps=1e-5):
    x = x_nchw.astype(jnp.float32)

    def conv(y, w, b):
        yp = jnp.pad(y, ((0, 0), (0, 0), (1, 1), (1, 1)), mode="edge")  # ReplicationPad2d(1)
        out = lax.conv_general_dilated(
            yp, w, window_strides=(1, 1), padding="VALID",
            dimension_numbers=("NCHW", "OIHW", "NCHW"),
            precision=lax.Precision.HIGHEST)
        return out + b[None, :, None, None]

    def inorm(y):
        mean = jnp.mean(y, axis=(2, 3), keepdims=True)
        var = jnp.mean(jnp.square(y - mean), axis=(2, 3), keepdims=True)
        return (y - mean) * lax.rsqrt(var + eps)

    y = jnp.maximum(inorm(conv(x, params["w1"], params["b1"])), 0.0)
    y = inorm(conv(y, params["w2"], params["b2"]))
    return x + y


if __name__ == "__main__":
    n_features, batch, spatial = 32, 2, 16

    key = jax.random.PRNGKey(0)
    pkey, xkey = jax.random.split(key)
    params = make_params(pkey, n_features, bias=True)
    x = jax.random.normal(xkey, (batch, n_features, spatial, spatial), jnp.float32)

    ref = resnet_block_reference(params, x)

    # Default path: bf16 MXU inputs, f32 accumulation / stats / residual.
    out_bf16 = jax.jit(resnet_block_forward)(params, x)
    jax.block_until_ready(out_bf16)
    assert out_bf16.shape == (batch, n_features, spatial, spatial), out_bf16.shape
    err_bf16 = float(jnp.max(jnp.abs(out_bf16 - ref)))
    assert err_bf16 < 5e-2, f"bf16-MXU path max abs error vs reference: {err_bf16}"

    # Full-f32 MXU path: tight check of layout / shift / IN / residual logic.
    out_f32 = jax.jit(
        functools.partial(resnet_block_forward, mxu_dtype=jnp.float32))(params, x)
    jax.block_until_ready(out_f32)
    err_f32 = float(jnp.max(jnp.abs(out_f32 - ref)))
    assert err_f32 < 1e-3, f"f32-MXU path max abs error vs reference: {err_f32}"

    print("KERNEL_OK")
</pallas_src>

<mosaic_0001>
module attributes {stable_mosaic.version = 11 : i64} {
  func.func @_resnet_block_kernel(%arg0: i32, %arg1: memref<1x32x256xf32, #tpu.memory_space<vmem>>, %arg2: memref<32x288xbf16, #tpu.memory_space<vmem>>, %arg3: memref<32x288xbf16, #tpu.memory_space<vmem>>, %arg4: memref<1x32x256xf32, #tpu.memory_space<vmem>>) attributes {dimension_semantics = [#tpu.dimension_semantics<parallel>], iteration_bounds = array<i64: 2>, scalar_prefetch = 0 : i64, scratch_operands = 0 : i64, tpu.core_type = #tpu.core_type<tc>, window_params = [{transform_indices = @transform_0, window_bounds = array<i64: 1, 32, 256>}, {pipeline_mode = #tpu.pipeline_mode<synchronous>, transform_indices = @transform_1, window_bounds = array<i64: 32, 288>}, {pipeline_mode = #tpu.pipeline_mode<synchronous>, transform_indices = @transform_2, window_bounds = array<i64: 32, 288>}, {transform_indices = @transform_3, window_bounds = array<i64: 1, 32, 256>}]} {
    %0 = tpu.iota {dimensions = array<i32: 1>} : vector<32x256xi32>
    %c16_i32 = arith.constant 16 : i32
    %c0_i32 = arith.constant 0 : i32
    %1 = arith.cmpi eq, %c16_i32, %c0_i32 : i32
    %c1_i32 = arith.constant 1 : i32
    %2 = arith.select %1, %c1_i32, %c16_i32 : i32
    %3 = vector.broadcast %2 : i32 to vector<32x256xi32>
    %4 = arith.remsi %0, %3 : vector<32x256xi32>
    %c0_i32_0 = arith.constant 0 : i32
    %5 = vector.broadcast %c0_i32_0 : i32 to vector<32x256xi32>
    %6 = arith.cmpi ne, %4, %5 : vector<32x256xi32>
    %c0_i32_1 = arith.constant 0 : i32
    %7 = vector.broadcast %c0_i32_1 : i32 to vector<32x256xi32>
    %8 = arith.cmpi slt, %4, %7 : vector<32x256xi32>
    %c0_i32_2 = arith.constant 0 : i32
    %9 = arith.cmpi slt, %2, %c0_i32_2 : i32
    %10 = vector.broadcast %9 : i1 to vector<32x256xi1>
    %11 = vector.broadcast %10 : vector<32x256xi1> to vector<32x256xi1>
    %12 = arith.xori %8, %11 : vector<32x256xi1>
    %13 = arith.andi %12, %6 : vector<32x256xi1>
    %14 = vector.broadcast %2 : i32 to vector<32x256xi32>
    %15 = arith.addi %4, %14 : vector<32x256xi32>
    %16 = arith.select %13, %15, %4 : vector<32x256xi1>, vector<32x256xi32>
    %c16_i32_3 = arith.constant 16 : i32
    %17 = vector.broadcast %c16_i32_3 : i32 to vector<32x256xi32>
    %18 = arith.cmpi slt, %0, %17 : vector<32x256xi32>
    %c240_i32 = arith.constant 240 : i32
    %19 = vector.broadcast %c240_i32 : i32 to vector<32x256xi32>
    %20 = arith.cmpi sge, %0, %19 : vector<32x256xi32>
    %c0_i32_4 = arith.constant 0 : i32
    %21 = vector.broadcast %c0_i32_4 : i32 to vector<32x256xi32>
    %22 = arith.cmpi eq, %16, %21 : vector<32x256xi32>
    %c15_i32 = arith.constant 15 : i32
    %23 = vector.broadcast %c15_i32 : i32 to vector<32x256xi32>
    %24 = arith.cmpi eq, %16, %23 : vector<32x256xi32>
    %c0 = arith.constant 0 : index
    %c0_5 = arith.constant 0 : index
    %c0_6 = arith.constant 0 : index
    %25 = vector.load %arg1[%c0, %c0_5, %c0_6] : memref<1x32x256xf32, #tpu.memory_space<vmem>>, vector<1x32x256xf32>
    %26 = vector.shape_cast %25 : vector<1x32x256xf32> to vector<32x256xf32>
    %c16_i32_7 = arith.constant 16 : i32
    %27 = tpu.dynamic_rotate %26 by %c16_i32_7 dim 1 : vector<32x256xf32>, i32 -> vector<32x256xf32>
    %28 = arith.select %18, %26, %27 : vector<32x256xi1>, vector<32x256xf32>
    %c1_i32_8 = arith.constant 1 : i32
    %29 = tpu.dynamic_rotate %28 by %c1_i32_8 dim 1 : vector<32x256xf32>, i32 -> vector<32x256xf32>
    %30 = arith.select %22, %28, %29 : vector<32x256xi1>, vector<32x256xf32>
    %c16_i32_9 = arith.constant 16 : i32
    %31 = tpu.dynamic_rotate %26 by %c16_i32_9 dim 1 : vector<32x256xf32>, i32 -> vector<32x256xf32>
    %32 = arith.select %18, %26, %31 : vector<32x256xi1>, vector<32x256xf32>
    %c16_i32_10 = arith.constant 16 : i32
    %33 = tpu.dynamic_rotate %26 by %c16_i32_10 dim 1 : vector<32x256xf32>, i32 -> vector<32x256xf32>
    %34 = arith.select %18, %26, %33 : vector<32x256xi1>, vector<32x256xf32>
    %c255_i32 = arith.constant 255 : i32
    %35 = tpu.dynamic_rotate %34 by %c255_i32 dim 1 : vector<32x256xf32>, i32 -> vector<32x256xf32>
    %36 = arith.select %24, %34, %35 : vector<32x256xi1>, vector<32x256xf32>
    %c1_i32_11 = arith.constant 1 : i32
    %37 = tpu.dynamic_rotate %26 by %c1_i32_11 dim 1 : vector<32x256xf32>, i32 -> vector<32x256xf32>
    %38 = arith.select %22, %26, %37 : vector<32x256xi1>, vector<32x256xf32>
    %c255_i32_12 = arith.constant 255 : i32
    %39 = tpu.dynamic_rotate %26 by %c255_i32_12 dim 1 : vector<32x256xf32>, i32 -> vector<32x256xf32>
    %40 = arith.select %24, %26, %39 : vector<32x256xi1>, vector<32x256xf32>
    %c240_i32_13 = arith.constant 240 : i32
    %41 = tpu.dynamic_rotate %26 by %c240_i32_13 dim 1 : vector<32x256xf32>, i32 -> vector<32x256xf32>
    %42 = arith.select %20, %26, %41 : vector<32x256xi1>, vector<32x256xf32>
    %c1_i32_14 = arith.constant 1 : i32
    %43 = tpu.dynamic_rotate %42 by %c1_i32_14 dim 1 : vector<32x256xf32>, i32 -> vector<32x256xf32>
    %44 = arith.select %22, %42, %43 : vector<32x256xi1>, vector<32x256xf32>
    %c240_i32_15 = arith.constant 240 : i32
    %45 = tpu.dynamic_rotate %26 by %c240_i32_15 dim 1 : vector<32x256xf32>, i32 -> vector<32x256xf32>
    %46 = arith.select %20, %26, %45 : vector<32x256xi1>, vector<32x256xf32>
    %c240_i32_16 = arith.constant 240 : i32
    %47 = tpu.dynamic_rotate %26 by %c240_i32_16 dim 1 : vector<32x256xf32>, i32 -> vector<32x256xf32>
    %48 = arith.select %20, %26, %47 : vector<32x256xi1>, vector<32x256xf32>
    %c255_i32_17 = arith.constant 255 : i32
    %49 = tpu.dynamic_rotate %48 by %c255_i32_17 dim 1 : vector<32x256xf32>, i32 -> vector<32x256xf32>
    %50 = arith.select %24, %48, %49 : vector<32x256xi1>, vector<32x256xf32>
    %51 = tpu.concatenate %30, %32, %36, %38, %26, %40, %44, %46, %50 in 0 : vector<32x256xf32>, vector<32x256xf32>, vector<32x256xf32>, vector<32x256xf32>, vector<32x256xf32>, vector<32x256xf32>, vector<32x256xf32>, vector<32x256xf32>, vector<32x256xf32> -> vector<288x256xf32>
    %52 = arith.truncf %51 : vector<288x256xf32> to vector<288x256xbf16>
    %c0_18 = arith.constant 0 : index
    %c0_19 = arith.constant 0 : index
    %53 = vector.load %arg2[%c0_18, %c0_19] : memref<32x288xbf16, #tpu.memory_space<vmem>>, vector<32x288xbf16>
    %cst = arith.constant dense<0.000000e+00> : vector<32x256xf32>
    %54 = tpu.matmul %53, %52, %cst {dimension_numbers = #tpu.dot_dimension_numbers<[1], [0], [0], [1], [0, 0, 1, 1], [], []>} : vector<32x288xbf16>, vector<288x256xbf16>, vector<32x256xf32> -> vector<32x256xf32>
    %cst_20 = arith.constant dense<0.000000e+00> : vector<32xf32>
    %55 = vector.multi_reduction <add>, %54, %cst_20 [1] : vector<32x256xf32> to vector<32xf32>
    %56 = vector.shape_cast %55 : vector<32xf32> to vector<32x1xf32>
    %57 = arith.mulf %54, %54 : vector<32x256xf32>
    %cst_21 = arith.constant dense<0.000000e+00> : vector<32xf32>
    %58 = vector.multi_reduction <add>, %57, %cst_21 [1] : vector<32x256xf32> to vector<32xf32>
    %59 = vector.shape_cast %58 : vector<32xf32> to vector<32x1xf32>
    %cst_22 = arith.constant 3.906250e-03 : f32
    %60 = vector.broadcast %cst_22 : f32 to vector<32x1xf32>
    %61 = arith.mulf %56, %60 : vector<32x1xf32>
    %cst_23 = arith.constant 3.906250e-03 : f32
    %62 = vector.broadcast %cst_23 : f32 to vector<32x1xf32>
    %63 = arith.mulf %59, %62 : vector<32x1xf32>
    %64 = arith.mulf %61, %61 : vector<32x1xf32>
    %65 = arith.subf %63, %64 : vector<32x1xf32>
    %66 = vector.broadcast %61 : vector<32x1xf32> to vector<32x256xf32>
    %67 = arith.subf %54, %66 : vector<32x256xf32>
    %cst_24 = arith.constant 9.99999974E-6 : f32
    %68 = vector.broadcast %cst_24 : f32 to vector<32x1xf32>
    %69 = arith.addf %65, %68 : vector<32x1xf32>
    %70 = math.rsqrt %69 : vector<32x1xf32>
    %71 = vector.broadcast %70 : vector<32x1xf32> to vector<32x256xf32>
    %72 = arith.mulf %67, %71 : vector<32x256xf32>
    %cst_25 = arith.constant 0.000000e+00 : f32
    %73 = vector.broadcast %cst_25 : f32 to vector<32x256xf32>
    %74 = arith.maximumf %72, %73 : vector<32x256xf32>
    %c16_i32_26 = arith.constant 16 : i32
    %75 = tpu.dynamic_rotate %74 by %c16_i32_26 dim 1 : vector<32x256xf32>, i32 -> vector<32x256xf32>
    %76 = arith.select %18, %74, %75 : vector<32x256xi1>, vector<32x256xf32>
    %c1_i32_27 = arith.constant 1 : i32
    %77 = tpu.dynamic_rotate %76 by %c1_i32_27 dim 1 : vector<32x256xf32>, i32 -> vector<32x256xf32>
    %78 = arith.select %22, %76, %77 : vector<32x256xi1>, vector<32x256xf32>
    %c16_i32_28 = arith.constant 16 : i32
    %79 = tpu.dynamic_rotate %74 by %c16_i32_28 dim 1 : vector<32x256xf32>, i32 -> vector<32x256xf32>
    %80 = arith.select %18, %74, %79 : vector<32x256xi1>, vector<32x256xf32>
    %c16_i32_29 = arith.constant 16 : i32
    %81 = tpu.dynamic_rotate %74 by %c16_i32_29 dim 1 : vector<32x256xf32>, i32 -> vector<32x256xf32>
    %82 = arith.select %18, %74, %81 : vector<32x256xi1>, vector<32x256xf32>
    %c255_i32_30 = arith.constant 255 : i32
    %83 = tpu.dynamic_rotate %82 by %c255_i32_30 dim 1 : vector<32x256xf32>, i32 -> vector<32x256xf32>
    %84 = arith.select %24, %82, %83 : vector<32x256xi1>, vector<32x256xf32>
    %c1_i32_31 = arith.constant 1 : i32
    %85 = tpu.dynamic_rotate %74 by %c1_i32_31 dim 1 : vector<32x256xf32>, i32 -> vector<32x256xf32>
    %86 = arith.select %22, %74, %85 : vector<32x256xi1>, vector<32x256xf32>
    %c255_i32_32 = arith.constant 255 : i32
    %87 = tpu.dynamic_rotate %74 by %c255_i32_32 dim 1 : vector<32x256xf32>, i32 -> vector<32x256xf32>
    %88 = arith.select %24, %74, %87 : vector<32x256xi1>, vector<32x256xf32>
    %c240_i32_33 = arith.constant 240 : i32
    %89 = tpu.dynamic_rotate %74 by %c240_i32_33 dim 1 : vector<32x256xf32>, i32 -> vector<32x256xf32>
    %90 = arith.select %20, %74, %89 : vector<32x256xi1>, vector<32x256xf32>
    %c1_i32_34 = arith.constant 1 : i32
    %91 = tpu.dynamic_rotate %90 by %c1_i32_34 dim 1 : vector<32x256xf32>, i32 -> vector<32x256xf32>
    %92 = arith.select %22, %90, %91 : vector<32x256xi1>, vector<32x256xf32>
    %c240_i32_35 = arith.constant 240 : i32
    %93 = tpu.dynamic_rotate %74 by %c240_i32_35 dim 1 : vector<32x256xf32>, i32 -> vector<32x256xf32>
    %94 = arith.select %20, %74, %93 : vector<32x256xi1>, vector<32x256xf32>
    %c240_i32_36 = arith.constant 240 : i32
    %95 = tpu.dynamic_rotate %74 by %c240_i32_36 dim 1 : vector<32x256xf32>, i32 -> vector<32x256xf32>
    %96 = arith.select %20, %74, %95 : vector<32x256xi1>, vector<32x256xf32>
    %c255_i32_37 = arith.constant 255 : i32
    %97 = tpu.dynamic_rotate %96 by %c255_i32_37 dim 1 : vector<32x256xf32>, i32 -> vector<32x256xf32>
    %98 = arith.select %24, %96, %97 : vector<32x256xi1>, vector<32x256xf32>
    %99 = tpu.concatenate %78, %80, %84, %86, %74, %88, %92, %94, %98 in 0 : vector<32x256xf32>, vector<32x256xf32>, vector<32x256xf32>, vector<32x256xf32>, vector<32x256xf32>, vector<32x256xf32>, vector<32x256xf32>, vector<32x256xf32>, vector<32x256xf32> -> vector<288x256xf32>
    %100 = arith.truncf %99 : vector<288x256xf32> to vector<288x256xbf16>
    %c0_38 = arith.constant 0 : index
    %c0_39 = arith.constant 0 : index
    %101 = vector.load %arg3[%c0_38, %c0_39] : memref<32x288xbf16, #tpu.memory_space<vmem>>, vector<32x288xbf16>
    %cst_40 = arith.constant dense<0.000000e+00> : vector<32x256xf32>
    %102 = tpu.matmul %101, %100, %cst_40 {dimension_numbers = #tpu.dot_dimension_numbers<[1], [0], [0], [1], [0, 0, 1, 1], [], []>} : vector<32x288xbf16>, vector<288x256xbf16>, vector<32x256xf32> -> vector<32x256xf32>
    %cst_41 = arith.constant dense<0.000000e+00> : vector<32xf32>
    %103 = vector.multi_reduction <add>, %102, %cst_41 [1] : vector<32x256xf32> to vector<32xf32>
    %104 = vector.shape_cast %103 : vector<32xf32> to vector<32x1xf32>
    %105 = arith.mulf %102, %102 : vector<32x256xf32>
    %cst_42 = arith.constant dense<0.000000e+00> : vector<32xf32>
    %106 = vector.multi_reduction <add>, %105, %cst_42 [1] : vector<32x256xf32> to vector<32xf32>
    %107 = vector.shape_cast %106 : vector<32xf32> to vector<32x1xf32>
    %cst_43 = arith.constant 3.906250e-03 : f32
    %108 = vector.broadcast %cst_43 : f32 to vector<32x1xf32>
    %109 = arith.mulf %104, %108 : vector<32x1xf32>
    %cst_44 = arith.constant 3.906250e-03 : f32
    %110 = vector.broadcast %cst_44 : f32 to vector<32x1xf32>
    %111 = arith.mulf %107, %110 : vector<32x1xf32>
    %112 = arith.mulf %109, %109 : vector<32x1xf32>
    %113 = arith.subf %111, %112 : vector<32x1xf32>
    %114 = vector.broadcast %109 : vector<32x1xf32> to vector<32x256xf32>
    %115 = arith.subf %102, %114 : vector<32x256xf32>
    %cst_45 = arith.constant 9.99999974E-6 : f32
    %116 = vector.broadcast %cst_45 : f32 to vector<32x1xf32>
    %117 = arith.addf %113, %116 : vector<32x1xf32>
    %118 = math.rsqrt %117 : vector<32x1xf32>
    %119 = vector.broadcast %118 : vector<32x1xf32> to vector<32x256xf32>
    %120 = arith.mulf %115, %119 : vector<32x256xf32>
    %121 = arith.addf %26, %120 : vector<32x256xf32>
    %c0_46 = arith.constant 0 : index
    %c0_47 = arith.constant 0 : index
    %c0_48 = arith.constant 0 : index
    %122 = vector.load %arg4[%c0_46, %c0_47, %c0_48] : memref<1x32x256xf32, #tpu.memory_space<vmem>>, vector<1x32x256xf32>
    %123 = vector.shape_cast %122 : vector<1x32x256xf32> to vector<32x256xf32>
    %124 = vector.shape_cast %121 : vector<32x256xf32> to vector<1x32x256xf32>
    tpu.vector_store %arg4[%c0_46, %c0_47, %c0_48], %124 {strides = array<i32>} : memref<1x32x256xf32, #tpu.memory_space<vmem>>, vector<1x32x256xf32>,
    return
  }
  func.func @transform_0(%arg0: i32) -> (i32, i32, i32) {
    %c0_i32 = arith.constant 0 : i32
    %c0_i32_0 = arith.constant 0 : i32
    %c0_i32_1 = arith.constant 0 : i32
    return %arg0, %c0_i32, %c0_i32_0 : i32, i32, i32
  }
  func.func @transform_1(%arg0: i32) -> (i32, i32) {
    %c0_i32 = arith.constant 0 : i32
    %c0_i32_0 = arith.constant 0 : i32
    %c0_i32_1 = arith.constant 0 : i32
    return %c0_i32, %c0_i32_0 : i32, i32
  }
  func.func @transform_2(%arg0: i32) -> (i32, i32) {
    %c0_i32 = arith.constant 0 : i32
    %c0_i32_0 = arith.constant 0 : i32
    %c0_i32_1 = arith.constant 0 : i32
    return %c0_i32, %c0_i32_0 : i32, i32
  }
  func.func @transform_3(%arg0: i32) -> (i32, i32, i32) {
    %c0_i32 = arith.constant 0 : i32
    %c0_i32_0 = arith.constant 0 : i32
    %c0_i32_1 = arith.constant 0 : i32
    return %arg0, %c0_i32, %c0_i32_0 : i32, i32, i32
  }
}

</mosaic_0001>

<llo_original>
// kernel: resnet_block_forward.1
$region0: #{resnet_block_forward.1}
  #allocation0 [shape = 'u32[]', space=smem, size = 0x4, offset = 0x4, fixed_abs, tag = 'smem constant byte address 0x4 - core index']
  #allocation1 [shape = 'u32[144,128]{1,0:T(1,128)}', space=vmem, size = 0x12000, scoped, tag = 'internal scratch']
  %s0 = inlined_call_operand.vmem [shape: f32[2,32,256], index: 0, kind: input, shape index: {}]
  %s1 = inlined_call_operand.vmem [shape: bf16[32,288], index: 1, kind: input, shape index: {}]
  %s2 = inlined_call_operand.vmem [shape: bf16[32,288], index: 2, kind: input, shape index: {}]
  %s3 = inlined_call_operand.vmem [shape: f32[2,32,256], index: 3, kind: output, shape index: {}]
  %s4 = sld [smem:[#allocation0]]
  $region45: #{resnet_block_forward.1} parent=0
    _
  %s6 = ssub.s32 1, %s4
  %s7 = scalar_select 0, %s6, %s4
  loop: start=0, step=1, limit=4
  $region2: #{resnet_block_forward.1} parent=0 // loop_pre_header
    _
  $region3: #{resnet_block_forward.1} parent=0 // loop_header
    %s9 = sphi 0, %s13
    %p10 = scmp.ge.s32.totalorder %s9, 4
    %s19 = sphi 0, %s21
    %s22 = sphi 0, %s19
    %s23 = sphi 0, %s22
    %s39 = sphi 0, %s23
    %s43 = sphi 0, %s43
    %s45 = sphi 0, %s43
    %s46 = sphi 0, %s45
    %s60 = sphi 0, %s46
    %s64 = sphi 0, %s64
    %s66 = sphi 0, %s64
    %s67 = sphi 0, %s66
    %s81 = sphi 0, %s67
    %s87 = sphi 0, %s89
    %s90 = sphi 0, %s87
    %s91 = sphi 0, %s90
    %s107 = sphi 0, %s91
  $region4: #{resnet_block_forward.1} parent=0 // loop_header_branch
    %12 = sbr.rel (%p10) target = $region8
  $region5: #{resnet_block_forward.1} parent=0 // loop_body
    %s14 = ssub.s32 %s9, 1
    %s15 = ssub.s32 %s9, 2
    %s16 = sadd.s32 %s9, 1
    %s17 = ssub.s32 %s9, %s16
    %p18 = scmp.eq.s32.totalorder %s17, 0
    %s20 = sadd.s32 %s19, 1
    %s21 = scalar_select %p18, %s19, %s20
    %p24 = pneg %p18
    %p25 = scmp.eq.s32.totalorder %s9, 1
    %p26 = por %p24, %p25
    %p27 = scmp.ne.s32.totalorder %s19, %s22
    %p28 = scmp.eq.s32.totalorder %s9, 0
    %p29 = por %p27, %p28
    %p30 = scmp.ne.s32.totalorder %s19, %s22
    %p31 = scmp.eq.s32.totalorder %s14, 1
    %p32 = por %p30, %p31
    %p33 = scmp.ne.s32.totalorder %s22, %s23
    %p34 = scmp.eq.s32.totalorder %s14, 0
    %p35 = por %p33, %p34
    %p36 = scmp.ne.s32.totalorder %s22, %s23
    %p37 = scmp.eq.s32.totalorder %s15, 1
    %p38 = por %p36, %p37
    %p40 = scmp.ne.s32.totalorder %s23, %s39
    %p41 = scmp.eq.s32.totalorder %s15, 0
    %p42 = por %p40, %p41
    %s44 = sadd.s32 %s43, 1
    %p47 = scmp.eq.s32.totalorder %s9, 1
    %p48 = scmp.ne.s32.totalorder %s43, %s45
    %p49 = scmp.eq.s32.totalorder %s9, 0
    %p50 = por %p48, %p49
    %p51 = scmp.ne.s32.totalorder %s43, %s45
    %p52 = scmp.eq.s32.totalorder %s14, 1
    %p53 = por %p51, %p52
    %p54 = scmp.ne.s32.totalorder %s45, %s46
    %p55 = scmp.eq.s32.totalorder %s14, 0
    %p56 = por %p54, %p55
    %p57 = scmp.ne.s32.totalorder %s45, %s46
    %p58 = scmp.eq.s32.totalorder %s15, 1
    %p59 = por %p57, %p58
    %p61 = scmp.ne.s32.totalorder %s46, %s60
    %p62 = scmp.eq.s32.totalorder %s15, 0
    %p63 = por %p61, %p62
    %s65 = sadd.s32 %s64, 1
    %p68 = scmp.eq.s32.totalorder %s9, 1
    %p69 = scmp.ne.s32.totalorder %s64, %s66
    %p70 = scmp.eq.s32.totalorder %s9, 0
    %p71 = por %p69, %p70
    %p72 = scmp.ne.s32.totalorder %s64, %s66
    %p73 = scmp.eq.s32.totalorder %s14, 1
    %p74 = por %p72, %p73
    %p75 = scmp.ne.s32.totalorder %s66, %s67
    %p76 = scmp.eq.s32.totalorder %s14, 0
    %p77 = por %p75, %p76
    %p78 = scmp.ne.s32.totalorder %s66, %s67
    %p79 = scmp.eq.s32.totalorder %s15, 1
    %p80 = por %p78, %p79
    %p82 = scmp.ne.s32.totalorder %s67, %s81
    %p83 = scmp.eq.s32.totalorder %s15, 0
    %p84 = por %p82, %p83
    %s85 = ssub.s32 %s9, %s16
    %p86 = scmp.eq.s32.totalorder %s85, 0
    %s88 = sadd.s32 %s87, 1
    %s89 = scalar_select %p86, %s87, %s88
    %p92 = pneg %p86
    %p93 = scmp.eq.s32.totalorder %s9, 1
    %p94 = por %p92, %p93
    %p95 = scmp.ne.s32.totalorder %s87, %s90
    %p96 = scmp.eq.s32.totalorder %s9, 0
    %p97 = por %p95, %p96
    %p98 = scmp.ne.s32.totalorder %s87, %s90
    %p99 = scmp.eq.s32.totalorder %s14, 1
    %p100 = por %p98, %p99
    %p101 = scmp.ne.s32.totalorder %s90, %s91
    %p102 = scmp.eq.s32.totalorder %s14, 0
    %p103 = por %p101, %p102
    %p104 = scmp.ne.s32.totalorder %s90, %s91
    %p105 = scmp.eq.s32.totalorder %s15, 1
    %p106 = por %p104, %p105
    %p108 = scmp.ne.s32.totalorder %s91, %s107
    %p109 = scmp.eq.s32.totalorder %s15, 0
    %p110 = por %p108, %p109
    %p111 = scmp.le.s32.totalorder 1, %s9
    %p112 = scmp.lt.s32.totalorder %s9, 3
    %p113 = pnand %p111, %p112
    %p114 = pneg %p113
    // Predicated region
    $region9: #{resnet_block_forward.1} parent=5 // pred_check
      _
    $region10: #{resnet_block_forward.1} parent=5 // pred_check_branch
      %116 = sbr.rel (%p113) target = $region12
    $region11: #{resnet_block_forward.1} parent=5 // pred_region
      %s117 = ssub.s32 %s9, 1
      // Predicated region
      $region13: #{resnet_block_forward.1} parent=11 // pred_check
        %p118 = pneg %p56
      $region14: #{resnet_block_forward.1} parent=11 // pred_check_branch
        %120 = sbr.rel (%p118) target = $region16
      $region15: #{resnet_block_forward.1} parent=11 // pred_region
        _
      $region16: #{resnet_block_forward.1} parent=11 // pred_fallthru
        _
      // Predicated region
      $region17: #{resnet_block_forward.1} parent=11 // pred_check
        %p121 = pneg %p77
      $region18: #{resnet_block_forward.1} parent=11 // pred_check_branch
        %123 = sbr.rel (%p121) target = $region20
      $region19: #{resnet_block_forward.1} parent=11 // pred_region
        _
      $region20: #{resnet_block_forward.1} parent=11 // pred_fallthru
        _
    $region12: #{resnet_block_forward.1} parent=5 // pred_fallthru
      _
    %p124 = scmp.lt.s32.totalorder %s9, 2
    // Predicated region
    $region21: #{resnet_block_forward.1} parent=5 // pred_check
      %p125 = pneg %p124
    $region22: #{resnet_block_forward.1} parent=5 // pred_check_branch
      %127 = sbr.rel (%p125) target = $region24
    $region23: #{resnet_block_forward.1} parent=5 // pred_region
      // Predicated region
      $region25: #{resnet_block_forward.1} parent=23 // pred_check
        %p128 = pneg %p29
      $region26: #{resnet_block_forward.1} parent=23 // pred_check_branch
        %130 = sbr.rel (%p128) target = $region28
      $region27: #{resnet_block_forward.1} parent=23 // pred_region
        %p131 = scmp.lt.s32.totalorder %s9, 1
        %s132 = scalar_select %p131, %s9, 1
        %s133 = smul.addr %s132, 8
        %s134 = smul.addr %s133, 8
        %s135 = scalar_lea.vmem %s0, %s134
      $region28: #{resnet_block_forward.1} parent=23 // pred_fallthru
        _
    $region24: #{resnet_block_forward.1} parent=5 // pred_fallthru
      _
    %p136 = scmp.le.s32.totalorder 1, %s9
    %p137 = scmp.lt.s32.totalorder %s9, 3
    %p138 = pnand %p136, %p137
    %p139 = pneg %p138
    // Predicated region
    $region29: #{resnet_block_forward.1} parent=5 // pred_check
      _
    $region30: #{resnet_block_forward.1} parent=5 // pred_check_branch
      %141 = sbr.rel (%p138) target = $region32
    $region31: #{resnet_block_forward.1} parent=5 // pred_region
      %s142 = ssub.s32 %s9, 1
      %p143 = scmp.lt.s32.totalorder %s14, 1
      %s144 = scalar_select %p143, %s14, 1
      %s145 = smul.addr %s144, 8
      %s146 = smul.addr %s145, 8
      %s147 = scalar_lea.vmem %s0, %s146
      %p148 = pneg %p35
      %p149 = pneg %p32
      %p150 = pneg %p56
      %p151 = pneg %p53
      %p152 = pneg %p77
      %p153 = pneg %p74
      %p154 = pneg %p103
      %p155 = pneg %p100
      %p156 = scmp.lt.s32.totalorder %s14, 1
      %s157 = scalar_select %p156, %s14, 1
      %s158 = smul.addr %s157, 8
      %s159 = smul.addr %s158, 8
      %s160 = scalar_lea.vmem %s3, %s159
      %p161 = scmp.lt.s32.totalorder %s14, 1
      %s162 = scalar_select %p161, %s14, 1
      %s163 = smul.addr %s162, 8
      %s164 = smul.addr %s163, 8
      %s165 = scalar_lea.vmem %s0, %s164
      %p166 = scmp.lt.s32.totalorder %s14, 1
      %s167 = scalar_select %p166, %s14, 1
      %s168 = smul.addr %s167, 8
      %s169 = smul.addr %s168, 8
      %s170 = scalar_lea.vmem %s3, %s169
      %v172 = vlaneseq
      %v173 = vand.u32 %v172, 127
      %v174 = vadd.s32 %v173, 128
      %vm175 = vcmp.lt.s32.totalorder %v173, 0
      %v176 = vsub.s32 0, %v173
      %v177 = vsel %vm175, %v176, %v173
      %v178 = vshrl.u32 %v177, 4
      %v179 = vand.u32 %v177, 15
      %v180 = vsub.s32 0, %v179
      %v181 = vsel %vm175, %v180, %v179
      %vm182 = vcmp.lt.s32.totalorder %v174, 0
      %v183 = vsub.s32 0, %v174
      %v184 = vsel %vm182, %v183, %v174
      %v185 = vshrl.u32 %v184, 4
      %v186 = vand.u32 %v184, 15
      %v187 = vsub.s32 0, %v186
      %v188 = vsel %vm182, %v187, %v186
      %vm189 = vcmp.ne.s32.totalorder %v181, 0
      %vm190 = vcmp.ne.s32.totalorder %v188, 0
      %vm191 = vcmp.lt.s32.totalorder %v181, 0
      %vm192 = vcmp.lt.s32.totalorder %v188, 0
      %vm193 = vmand %vm191, %vm189
      %vm194 = vmand %vm192, %vm190
      %v195 = vadd.s32 %v181, 16
      %v196 = vadd.s32 %v188, 16
      %v197 = vsel %vm193, %v195, %v181
      %v198 = vsel %vm194, %v196, %v188
      %vm199 = vcmp.lt.s32.totalorder %v173, 16
      %vm200 = vcmp.lt.s32.totalorder %v174, 16
      %vm201 = vcmp.ge.s32.totalorder %v173, 240
      %vm202 = vcmp.ge.s32.totalorder %v174, 240
      %vm203 = vcmp.eq.s32.totalorder %v197, 0
      %vm204 = vcmp.eq.s32.totalorder %v198, 0
      %vm205 = vcmp.eq.s32.totalorder %v197, 15
      %vm206 = vcmp.eq.s32.totalorder %v198, 15
      %v207 = vld [vmem:[%s165] sm:$0xff]
      %v208 = vld [vmem:[%s165 + $0x8] sm:$0xff]
      %v209 = vld [vmem:[%s165 + $0x10] sm:$0xff]
      %v210 = vld [vmem:[%s165 + $0x18] sm:$0xff]
      %v211 = vld [vmem:[%s165 + $0x20] sm:$0xff]
      %v212 = vld [vmem:[%s165 + $0x28] sm:$0xff]
      %v213 = vld [vmem:[%s165 + $0x30] sm:$0xff]
      %v214 = vld [vmem:[%s165 + $0x38] sm:$0xff]
      %215 = vrot.lane.b32.xlu0 %v207, 16
      %v216 = vpop.permute.xlu0 %215
      %217 = vrot.lane.b32.xlu0 %v209, 16
      %v218 = vpop.permute.xlu0 %217
      %219 = vrot.lane.b32.xlu0 %v211, 16
      %v220 = vpop.permute.xlu0 %219
      %221 = vrot.lane.b32.xlu0 %v213, 16
      %v222 = vpop.permute.xlu0 %221
      %223 = vrot.lane.b32.xlu0 %v208, 16
      %v224 = vpop.permute.xlu0 %223
      %225 = vrot.lane.b32.xlu0 %v210, 16
      %v226 = vpop.permute.xlu0 %225
      %227 = vrot.lane.b32.xlu0 %v212, 16
      %v228 = vpop.permute.xlu0 %227
      %229 = vrot.lane.b32.xlu0 %v214, 16
      %v230 = vpop.permute.xlu0 %229
      %v231 = vsel %vm199, %v216, %v224
      %v232 = vsel %vm199, %v218, %v226
      %v233 = vsel %vm199, %v220, %v228
      %v234 = vsel %vm199, %v222, %v230
      %v235 = vsel %vm199, %v224, %v216
      %v236 = vsel %vm199, %v226, %v218
      %v237 = vsel %vm199, %v228, %v220
      %v238 = vsel %vm199, %v230, %v222
      %v239 = vsel %vm199, %v207, %v235
      %v240 = vsel %vm200, %v208, %v231
      %v241 = vsel %vm199, %v209, %v236
      %v242 = vsel %vm200, %v210, %v232
      %v243 = vsel %vm199, %v211, %v237
      %v244 = vsel %vm200, %v212, %v233
      %v245 = vsel %vm199, %v213, %v238
      %v246 = vsel %vm200, %v214, %v234
      %247 = vrot.lane.b32.xlu0 %v239, 1
      %v248 = vpop.permute.xlu0 %247
      %249 = vrot.lane.b32.xlu0 %v241, 1
      %v250 = vpop.permute.xlu0 %249
      %251 = vrot.lane.b32.xlu0 %v243, 1
      %v252 = vpop.permute.xlu0 %251
      %253 = vrot.lane.b32.xlu0 %v245, 1
      %v254 = vpop.permute.xlu0 %253
      %255 = vrot.lane.b32.xlu0 %v240, 1
      %v256 = vpop.permute.xlu0 %255
      %257 = vrot.lane.b32.xlu0 %v242, 1
      %v258 = vpop.permute.xlu0 %257
      %259 = vrot.lane.b32.xlu0 %v244, 1
      %v260 = vpop.permute.xlu0 %259
      %261 = vrot.lane.b32.xlu0 %v246, 1
      %v262 = vpop.permute.xlu0 %261
      %vm263 = vcmp.lt.s32.totalorder %v173, 1
      %v264 = vsel %vm263, %v248, %v256
      %v265 = vsel %vm263, %v250, %v258
      %v266 = vsel %vm263, %v252, %v260
      %v267 = vsel %vm263, %v254, %v262
      %v268 = vsel %vm263, %v256, %v248
      %v269 = vsel %vm263, %v258, %v250
      %v270 = vsel %vm263, %v260, %v252
      %v271 = vsel %vm263, %v262, %v254
      %v272 = vsel %vm203, %v239, %v268
      %v273 = vsel %vm204, %v240, %v264
      %v274 = vsel %vm203, %v241, %v269
      %v275 = vsel %vm204, %v242, %v265
      %v276 = vsel %vm203, %v243, %v270
      %v277 = vsel %vm204, %v244, %v266
      %v278 = vsel %vm203, %v245, %v271
      %v279 = vsel %vm204, %v246, %v267
      %280 = vrot.lane.b32.xlu0 %v239, 127
      %v281 = vpop.permute.xlu0 %280
      %282 = vrot.lane.b32.xlu0 %v241, 127
      %v283 = vpop.permute.xlu0 %282
      %284 = vrot.lane.b32.xlu0 %v243, 127
      %v285 = vpop.permute.xlu0 %284
      %286 = vrot.lane.b32.xlu0 %v245, 127
      %v287 = vpop.permute.xlu0 %286
      %288 = vrot.lane.b32.xlu0 %v240, 127
      %v289 = vpop.permute.xlu0 %288
      %290 = vrot.lane.b32.xlu0 %v242, 127
      %v291 = vpop.permute.xlu0 %290
      %292 = vrot.lane.b32.xlu0 %v244, 127
      %v293 = vpop.permute.xlu0 %292
      %294 = vrot.lane.b32.xlu0 %v246, 127
      %v295 = vpop.permute.xlu0 %294
      %vm296 = vcmp.lt.s32.totalorder %v173, 127
      %v297 = vsel %vm296, %v281, %v289
      %v298 = vsel %vm296, %v283, %v291
      %v299 = vsel %vm296, %v285, %v293
      %v300 = vsel %vm296, %v287, %v295
      %v301 = vsel %vm296, %v289, %v281
      %v302 = vsel %vm296, %v291, %v283
      %v303 = vsel %vm296, %v293, %v285
      %v304 = vsel %vm296, %v295, %v287
      %v305 = vsel %vm205, %v239, %v297
      %v306 = vsel %vm206, %v240, %v301
      %v307 = vsel %vm205, %v241, %v298
      %v308 = vsel %vm206, %v242, %v302
      %v309 = vsel %vm205, %v243, %v299
      %v310 = vsel %vm206, %v244, %v303
      %v311 = vsel %vm205, %v245, %v300
      %v312 = vsel %vm206, %v246, %v304
      %313 = vrot.lane.b32.xlu0 %v207, 1
      %v314 = vpop.permute.xlu0 %313
      %315 = vrot.lane.b32.xlu0 %v209, 1
      %v316 = vpop.permute.xlu0 %315
      %317 = vrot.lane.b32.xlu0 %v211, 1
      %v318 = vpop.permute.xlu0 %317
      %319 = vrot.lane.b32.xlu0 %v213, 1
      %v320 = vpop.permute.xlu0 %319
      %321 = vrot.lane.b32.xlu0 %v208, 1
      %v322 = vpop.permute.xlu0 %321
      %323 = vrot.lane.b32.xlu0 %v210, 1
      %v324 = vpop.permute.xlu0 %323
      %325 = vrot.lane.b32.xlu0 %v212, 1
      %v326 = vpop.permute.xlu0 %325
      %327 = vrot.lane.b32.xlu0 %v214, 1
      %v328 = vpop.permute.xlu0 %327
      %v329 = vsel %vm263, %v314, %v322
      %v330 = vsel %vm263, %v316, %v324
      %v331 = vsel %vm263, %v318, %v326
      %v332 = vsel %vm263, %v320, %v328
      %v333 = vsel %vm263, %v322, %v314
      %v334 = vsel %vm263, %v324, %v316
      %v335 = vsel %vm263, %v326, %v318
      %v336 = vsel %vm263, %v328, %v320
      %v337 = vsel %vm203, %v207, %v333
      %v338 = vsel %vm204, %v208, %v329
      %v339 = vsel %vm203, %v209, %v334
      %v340 = vsel %vm204, %v210, %v330
      %v341 = vsel %vm203, %v211, %v335
      %v342 = vsel %vm204, %v212, %v331
      %v343 = vsel %vm203, %v213, %v336
      %v344 = vsel %vm204, %v214, %v332
      %345 = vrot.lane.b32.xlu0 %v207, 127
      %v346 = vpop.permute.xlu0 %345
      %347 = vrot.lane.b32.xlu0 %v209, 127
      %v348 = vpop.permute.xlu0 %347
      %349 = vrot.lane.b32.xlu0 %v211, 127
      %v350 = vpop.permute.xlu0 %349
      %351 = vrot.lane.b32.xlu0 %v213, 127
      %v352 = vpop.permute.xlu0 %351
      %353 = vrot.lane.b32.xlu0 %v208, 127
      %v354 = vpop.permute.xlu0 %353
      %355 = vrot.lane.b32.xlu0 %v210, 127
      %v356 = vpop.permute.xlu0 %355
      %357 = vrot.lane.b32.xlu0 %v212, 127
      %v358 = vpop.permute.xlu0 %357
      %359 = vrot.lane.b32.xlu0 %v214, 127
      %v360 = vpop.permute.xlu0 %359
      %v361 = vsel %vm296, %v346, %v354
      %v362 = vsel %vm296, %v348, %v356
      %v363 = vsel %vm296, %v350, %v358
      %v364 = vsel %vm296, %v352, %v360
      %v365 = vsel %vm296, %v354, %v346
      %v366 = vsel %vm296, %v356, %v348
      %v367 = vsel %vm296, %v358, %v350
      %v368 = vsel %vm296, %v360, %v352
      %v369 = vsel %vm205, %v207, %v361
      %v370 = vsel %vm206, %v208, %v365
      %v371 = vsel %vm205, %v209, %v362
      %v372 = vsel %vm206, %v210, %v366
      %v373 = vsel %vm205, %v211, %v363
      %v374 = vsel %vm206, %v212, %v367
      %v375 = vsel %vm205, %v213, %v364
      %v376 = vsel %vm206, %v214, %v368
      %377 = vrot.lane.b32.xlu0 %v207, 112
      %v378 = vpop.permute.xlu0 %377
      %379 = vrot.lane.b32.xlu0 %v209, 112
      %v380 = vpop.permute.xlu0 %379
      %381 = vrot.lane.b32.xlu0 %v211, 112
      %v382 = vpop.permute.xlu0 %381
      %383 = vrot.lane.b32.xlu0 %v213, 112
      %v384 = vpop.permute.xlu0 %383
      %385 = vrot.lane.b32.xlu0 %v208, 112
      %v386 = vpop.permute.xlu0 %385
      %387 = vrot.lane.b32.xlu0 %v210, 112
      %v388 = vpop.permute.xlu0 %387
      %389 = vrot.lane.b32.xlu0 %v212, 112
      %v390 = vpop.permute.xlu0 %389
      %391 = vrot.lane.b32.xlu0 %v214, 112
      %v392 = vpop.permute.xlu0 %391
      %vm393 = vcmp.lt.s32.totalorder %v173, 112
      %v394 = vsel %vm393, %v378, %v386
      %v395 = vsel %vm393, %v380, %v388
      %v396 = vsel %vm393, %v382, %v390
      %v397 = vsel %vm393, %v384, %v392
      %v398 = vsel %vm393, %v386, %v378
      %v399 = vsel %vm393, %v388, %v380
      %v400 = vsel %vm393, %v390, %v382
      %v401 = vsel %vm393, %v392, %v384
      %v402 = vsel %vm201, %v207, %v394
      %v403 = vsel %vm202, %v208, %v398
      %v404 = vsel %vm201, %v209, %v395
      %v405 = vsel %vm202, %v210, %v399
      %v406 = vsel %vm201, %v211, %v396
      %v407 = vsel %vm202, %v212, %v400
      %v408 = vsel %vm201, %v213, %v397
      %v409 = vsel %vm202, %v214, %v401
      %410 = vrot.lane.b32.xlu0 %v402, 1
      %v411 = vpop.permute.xlu0 %410
      %412 = vrot.lane.b32.xlu0 %v404, 1
      %v413 = vpop.permute.xlu0 %412
      %414 = vrot.lane.b32.xlu0 %v406, 1
      %v415 = vpop.permute.xlu0 %414
      %416 = vrot.lane.b32.xlu0 %v408, 1
      %v417 = vpop.permute.xlu0 %416
      %418 = vrot.lane.b32.xlu0 %v403, 1
      %v419 = vpop.permute.xlu0 %418
      %420 = vrot.lane.b32.xlu0 %v405, 1
      %v421 = vpop.permute.xlu0 %420
      %422 = vrot.lane.b32.xlu0 %v407, 1
      %v423 = vpop.permute.xlu0 %422
      %424 = vrot.lane.b32.xlu0 %v409, 1
      %v425 = vpop.permute.xlu0 %424
      %v426 = vsel %vm263, %v411, %v419
      %v427 = vsel %vm263, %v413, %v421
      %v428 = vsel %vm263, %v415, %v423
      %v429 = vsel %vm263, %v417, %v425
      %v430 = vsel %vm263, %v419, %v411
      %v431 = vsel %vm263, %v421, %v413
      %v432 = vsel %vm263, %v423, %v415
      %v433 = vsel %vm263, %v425, %v417
      %v434 = vsel %vm203, %v402, %v430
      %v435 = vsel %vm204, %v403, %v426
      %v436 = vsel %vm203, %v404, %v431
      %v437 = vsel %vm204, %v405, %v427
      %v438 = vsel %vm203, %v406, %v432
      %v439 = vsel %vm204, %v407, %v428
      %v440 = vsel %vm203, %v408, %v433
      %v441 = vsel %vm204, %v409, %v429
      %442 = vrot.lane.b32.xlu0 %v402, 127
      %v443 = vpop.permute.xlu0 %442
      %444 = vrot.lane.b32.xlu0 %v404, 127
      %v445 = vpop.permute.xlu0 %444
      %446 = vrot.lane.b32.xlu0 %v406, 127
      %v447 = vpop.permute.xlu0 %446
      %448 = vrot.lane.b32.xlu0 %v408, 127
      %v449 = vpop.permute.xlu0 %448
      %450 = vrot.lane.b32.xlu0 %v403, 127
      %v451 = vpop.permute.xlu0 %450
      %452 = vrot.lane.b32.xlu0 %v405, 127
      %v453 = vpop.permute.xlu0 %452
      %454 = vrot.lane.b32.xlu0 %v407, 127
      %v455 = vpop.permute.xlu0 %454
      %456 = vrot.lane.b32.xlu0 %v409, 127
      %v457 = vpop.permute.xlu0 %456
      %v458 = vsel %vm296, %v443, %v451
      %v459 = vsel %vm296, %v445, %v453
      %v460 = vsel %vm296, %v447, %v455
      %v461 = vsel %vm296, %v449, %v457
      %v462 = vsel %vm296, %v451, %v443
      %v463 = vsel %vm296, %v453, %v445
      %v464 = vsel %vm296, %v455, %v447
      %v465 = vsel %vm296, %v457, %v449
      %v466 = vsel %vm205, %v402, %v458
      %v467 = vsel %vm206, %v403, %v462
      %v468 = vsel %vm205, %v404, %v459
      %v469 = vsel %vm206, %v405, %v463
      %v470 = vsel %vm205, %v406, %v460
      %v471 = vsel %vm206, %v407, %v464
      %v472 = vsel %vm205, %v408, %v461
      %v473 = vsel %vm206, %v409, %v465
      %v474 = vpack.c.bf16 %v274, %v272
      %v475 = vpack.c.bf16 %v275, %v273
      %v476 = vpack.c.bf16 %v278, %v276
      %v477 = vpack.c.bf16 %v279, %v277
      %v478 = vpack.c.bf16 %v241, %v239
      %v479 = vpack.c.bf16 %v242, %v240
      %v480 = vpack.c.bf16 %v245, %v243
      %v481 = vpack.c.bf16 %v246, %v244
      %v482 = vpack.c.bf16 %v307, %v305
      %v483 = vpack.c.bf16 %v308, %v306
      %v484 = vpack.c.bf16 %v311, %v309
      %v485 = vpack.c.bf16 %v312, %v310
      %v486 = vpack.c.bf16 %v339, %v337
      %v487 = vpack.c.bf16 %v340, %v338
      %v488 = vpack.c.bf16 %v343, %v341
      %v489 = vpack.c.bf16 %v344, %v342
      %v490 = vpack.c.bf16 %v209, %v207
      %v491 = vpack.c.bf16 %v210, %v208
      %v492 = vpack.c.bf16 %v213, %v211
      %v493 = vpack.c.bf16 %v214, %v212
      %v494 = vpack.c.bf16 %v371, %v369
      %v495 = vpack.c.bf16 %v372, %v370
      %v496 = vpack.c.bf16 %v375, %v373
      %v497 = vpack.c.bf16 %v376, %v374
      %v498 = vpack.c.bf16 %v436, %v434
      %v499 = vpack.c.bf16 %v437, %v435
      %v500 = vpack.c.bf16 %v440, %v438
      %v501 = vpack.c.bf16 %v441, %v439
      %v502 = vpack.c.bf16 %v404, %v402
      %v503 = vpack.c.bf16 %v405, %v403
      %v504 = vpack.c.bf16 %v408, %v406
      %v505 = vpack.c.bf16 %v409, %v407
      %v506 = vpack.c.bf16 %v468, %v466
      %v507 = vpack.c.bf16 %v469, %v467
      %v508 = vpack.c.bf16 %v472, %v470
      %v509 = vpack.c.bf16 %v473, %v471
      %v510 = vld [vmem:[%s1] sm:$0xff]
      %v511 = vld [vmem:[%s1 + $0x8] sm:$0xf]
      %v512 = vld [vmem:[%s1 + $0xc] sm:$0xff]
      %v513 = vld [vmem:[%s1 + $0x14] sm:$0xf]
      %v514 = vld [vmem:[%s1 + $0x18] sm:$0xff]
      %v515 = vld [vmem:[%s1 + $0x20] sm:$0xf]
      %v516 = vld [vmem:[%s1 + $0x24] sm:$0xff]
      %v517 = vld [vmem:[%s1 + $0x2c] sm:$0xf]
      %v526 = vunpack.c.l.b16 %v510
      %v527 = vunpack.c.h.b16 %v510
      %v528 = vunpack.c.l.b16 %v511
      %v529 = vunpack.c.l.b16 %v512
      %v530 = vunpack.c.h.b16 %v512
      %v531 = vunpack.c.l.b16 %v513
      %v532 = vunpack.c.l.b16 %v514
      %v533 = vunpack.c.h.b16 %v514
      %v534 = vunpack.c.l.b16 %v515
      %v535 = vunpack.c.l.b16 %v516
      %v536 = vunpack.c.h.b16 %v516
      %v537 = vunpack.c.l.b16 %v517
      %v538 = vpack.c.b16 %v529, %v526
      %v539 = vpack.c.b16 %v530, %v527
      %v540 = vpack.c.b16 %v531, %v528
      %v541 = vpack.c.b16 %v535, %v532
      %v542 = vpack.c.b16 %v536, %v533
      %v543 = vpack.c.b16 %v537, %v534
      %vm548 = vcmask 261120
      %v550 = vsel %vm548, %v540, 0
      %v553 = vsel %vm548, %v543, 0
      %555 = vmatprep.subr.bf16.mxu0 %v475
      %556 = vmatpush1.bf16.msra.mxu0 %v474
      %557 = vmatprep.subr.bf16.mxu0 %v477
      %558 = vmatpush1.bf16.msra.mxu0 %v476
      %559 = vmatprep.subr.bf16.mxu0 %v479
      %560 = vmatpush1.bf16.msra.mxu0 %v478
      %561 = vmatprep.subr.bf16.mxu0 %v481
      %562 = vmatpush1.bf16.msra.mxu0 %v480
      %563 = vmatprep.subr.bf16.mxu0 %v483
      %564 = vmatpush1.bf16.msra.mxu0 %v482
      %565 = vmatprep.subr.bf16.mxu0 %v485
      %566 = vmatpush1.bf16.msra.mxu0 %v484
      %567 = vmatprep.subr.bf16.mxu0 %v487
      %568 = vmatpush1.bf16.msra.mxu0 %v486
      %569 = vmatprep.subr.bf16.mxu0 %v489
      %570 = vmatpush1.bf16.msra.mxu0 %v488
      %571 = vmatprep.subr.bf16.mxu0 %v491
      %572 = vmatpush1.bf16.msra.mxu0 %v490
      %573 = vmatprep.subr.bf16.mxu0 %v493
      %574 = vmatpush1.bf16.msra.mxu0 %v492
      %575 = vmatprep.subr.bf16.mxu0 %v495
      %576 = vmatpush1.bf16.msra.mxu0 %v494
      %577 = vmatprep.subr.bf16.mxu0 %v497
      %578 = vmatpush1.bf16.msra.mxu0 %v496
      %579 = vmatprep.subr.bf16.mxu0 %v499
      %580 = vmatpush1.bf16.msra.mxu0 %v498
      %581 = vmatprep.subr.bf16.mxu0 %v501
      %582 = vmatpush1.bf16.msra.mxu0 %v500
      %583 = vmatprep.subr.bf16.mxu0 %v503
      %584 = vmatpush1.bf16.msra.mxu0 %v502
      %585 = vmatprep.subr.bf16.mxu0 %v505
      %586 = vmatpush1.bf16.msra.mxu0 %v504
      %587 = vmatprep.mubr.bf16.mxu0 %v539
      %588 = vmatmul.mubr.bf16.gmra.mrb[0].mxu0 %v538
      %v589 = vpop.f32.mrb[0].mxu0
      %v590 = vadd.f32 0.0, %v589
      %v591 = vpop.f32.mrb[0].mxu0
      %v592 = vadd.f32 0.0, %v591
      %v593 = vpop.f32.mrb[0].mxu0
      %v594 = vadd.f32 0.0, %v593
      %v595 = vpop.f32.mrb[0].mxu0
      %v596 = vadd.f32 0.0, %v595
      %597 = vmatprep.mubr.bf16.mxu0 %v542
      %598 = vmatmul.mubr.bf16.gmra.mrb[0].mxu0 %v541
      %v599 = vpop.f32.mrb[0].mxu0
      %v600 = vadd.f32 0.0, %v599
      %v601 = vpop.f32.mrb[0].mxu0
      %v602 = vadd.f32 0.0, %v601
      %v603 = vpop.f32.mrb[0].mxu0
      %v604 = vadd.f32 0.0, %v603
      %v605 = vpop.f32.mrb[0].mxu0
      %v606 = vadd.f32 0.0, %v605
      %607 = vdwg.mxu0
      %608 = vmatprep.subr.bf16.mxu0 %v507
      %609 = vmatpush1.bf16.msra.mxu0 %v506
      %610 = vmatprep.subr.bf16.mxu0 %v509
      %611 = vmatpush1.bf16.msra.mxu0 %v508
      %612 = vmatprep.subr.bf16.mxu0 0
      %613 = vmatpush1.bf16.msra.mxu0 0
      %614 = vmatprep.subr.bf16.mxu0 0
      %615 = vmatpush1.bf16.msra.mxu0 0
      %616 = vmatprep.subr.bf16.mxu0 0
      %617 = vmatpush1.bf16.msra.mxu0 0
      %618 = vmatprep.subr.bf16.mxu0 0
      %619 = vmatpush1.bf16.msra.mxu0 0
      %620 = vmatprep.subr.bf16.mxu0 0
      %621 = vmatpush1.bf16.msra.mxu0 0
      %622 = vmatprep.subr.bf16.mxu0 0
      %623 = vmatpush1.bf16.msra.mxu0 0
      %624 = vmatprep.subr.bf16.mxu0 0
      %625 = vmatpush1.bf16.msra.mxu0 0
      %626 = vmatprep.subr.bf16.mxu0 0
      %627 = vmatpush1.bf16.msra.mxu0 0
      %628 = vmatprep.subr.bf16.mxu0 0
      %629 = vmatpush1.bf16.msra.mxu0 0
      %630 = vmatprep.subr.bf16.mxu0 0
      %631 = vmatpush1.bf16.msra.mxu0 0
      %632 = vmatprep.subr.bf16.mxu0 0
      %633 = vmatpush1.bf16.msra.mxu0 0
      %634 = vmatprep.subr.bf16.mxu0 0
      %635 = vmatpush1.bf16.msra.mxu0 0
      %636 = vmatprep.subr.bf16.mxu0 0
      %637 = vmatpush1.bf16.msra.mxu0 0
      %638 = vmatprep.subr.bf16.mxu0 0
      %639 = vmatpush1.bf16.msra.mxu0 0
      %640 = vmatprep.mubr.bf16.mxu0 0
      %641 = vmatmul.mubr.bf16.gmra.mrb[0].mxu0 %v550
      %v642 = vpop.f32.mrb[0].mxu0
      %v643 = vadd.f32 %v590, %v642
      %v644 = vpop.f32.mrb[0].mxu0
      %v645 = vadd.f32 %v592, %v644
      %v646 = vpop.f32.mrb[0].mxu0
      %v647 = vadd.f32 %v594, %v646
      %v648 = vpop.f32.mrb[0].mxu0
      %v649 = vadd.f32 %v596, %v648
      %650 = vmatprep.mubr.bf16.mxu0 0
      %651 = vmatmul.mubr.bf16.gmra.mrb[0].mxu0 %v553
      %v652 = vpop.f32.mrb[0].mxu0
      %v653 = vadd.f32 %v600, %v652
      %v654 = vpop.f32.mrb[0].mxu0
      %v655 = vadd.f32 %v602, %v654
      %v656 = vpop.f32.mrb[0].mxu0
      %v657 = vadd.f32 %v604, %v656
      %v658 = vpop.f32.mrb[0].mxu0
      %v659 = vadd.f32 %v606, %v658
      %660 = vdwg.mxu0
      %v661 = vadd.f32 %v643, %v645
      %662 = vadd.xlane.f32.xlu0 %v661
      %v663 = vpop.xlane.xlu0 %662
      %v664 = vadd.f32 %v647, %v649
      %665 = vadd.xlane.f32.xlu0 %v664
      %v666 = vpop.xlane.xlu0 %665
      %v667 = vadd.f32 %v653, %v655
      %668 = vadd.xlane.f32.xlu0 %v667
      %v669 = vpop.xlane.xlu0 %668
      %v670 = vadd.f32 %v657, %v659
      %671 = vadd.xlane.f32.xlu0 %v670
      %v672 = vpop.xlane.xlu0 %671
      %v673 = vmul.f32 %v643, %v643
      %v674 = vmul.f32 %v645, %v645
      %v675 = vmul.f32 %v647, %v647
      %v676 = vmul.f32 %v649, %v649
      %v677 = vmul.f32 %v653, %v653
      %v678 = vmul.f32 %v655, %v655
      %v679 = vmul.f32 %v657, %v657
      %v680 = vmul.f32 %v659, %v659
      %v681 = vadd.f32 %v673, %v674
      %682 = vadd.xlane.f32.xlu0 %v681
      %v683 = vpop.xlane.xlu0 %682
      %v684 = vadd.f32 %v675, %v676
      %685 = vadd.xlane.f32.xlu0 %v684
      %v686 = vpop.xlane.xlu0 %685
      %v687 = vadd.f32 %v677, %v678
      %688 = vadd.xlane.f32.xlu0 %v687
      %v689 = vpop.xlane.xlu0 %688
      %v690 = vadd.f32 %v679, %v680
      %691 = vadd.xlane.f32.xlu0 %v690
      %v692 = vpop.xlane.xlu0 %691
      %v693 = vmul.f32 %v663, 0.00390625
      %v694 = vmul.f32 %v666, 0.00390625
      %v695 = vmul.f32 %v669, 0.00390625
      %v696 = vmul.f32 %v672, 0.00390625
      %v697 = vmul.f32 %v683, 0.00390625
      %v698 = vmul.f32 %v686, 0.00390625
      %v699 = vmul.f32 %v689, 0.00390625
      %v700 = vmul.f32 %v692, 0.00390625
      %v701 = vmul.f32 %v693, %v693
      %v702 = vmul.f32 %v694, %v694
      %v703 = vmul.f32 %v695, %v695
      %v704 = vmul.f32 %v696, %v696
      %v705 = vsub.f32 %v697, %v701
      %v706 = vsub.f32 %v698, %v702
      %v707 = vsub.f32 %v699, %v703
      %v708 = vsub.f32 %v700, %v704
      %v709 = vsub.f32 %v643, %v693
      %v710 = vsub.f32 %v645, %v693
      %v711 = vsub.f32 %v647, %v694
      %v712 = vsub.f32 %v649, %v694
      %v713 = vsub.f32 %v653, %v695
      %v714 = vsub.f32 %v655, %v695
      %v715 = vsub.f32 %v657, %v696
      %v716 = vsub.f32 %v659, %v696
      %v717 = vadd.f32 %v705, 1e-05
      %v718 = vadd.f32 %v706, 1e-05
      %v719 = vadd.f32 %v707, 1e-05
      %v720 = vadd.f32 %v708, 1e-05
      %v721 = vrsqrt.pop %v717
      %v722 = vrsqrt.pop %v718
      %v723 = vrsqrt.pop %v719
      %v724 = vrsqrt.pop %v720
      %v725 = vmul.f32 %v709, %v721
      %v726 = vmul.f32 %v710, %v721
      %v727 = vmul.f32 %v711, %v722
      %v728 = vmul.f32 %v712, %v722
      %v729 = vmul.f32 %v713, %v723
      %v730 = vmul.f32 %v714, %v723
      %v731 = vmul.f32 %v715, %v724
      %v732 = vmul.f32 %v716, %v724
      %v733 = vmax.f32 %v725, 0.0
      %v734 = vmax.f32 %v726, 0.0
      %v735 = vmax.f32 %v727, 0.0
      %v736 = vmax.f32 %v728, 0.0
      %v737 = vmax.f32 %v729, 0.0
      %v738 = vmax.f32 %v730, 0.0
      %v739 = vmax.f32 %v731, 0.0
      %v740 = vmax.f32 %v732, 0.0
      %741 = vrot.lane.b32.xlu0 %v733, 16
      %v742 = vpop.permute.xlu0 %741
      %743 = vrot.lane.b32.xlu0 %v735, 16
      %v744 = vpop.permute.xlu0 %743
      %745 = vrot.lane.b32.xlu0 %v737, 16
      %v746 = vpop.permute.xlu0 %745
      %747 = vrot.lane.b32.xlu0 %v739, 16
      %v748 = vpop.permute.xlu0 %747
      %749 = vrot.lane.b32.xlu0 %v734, 16
      %v750 = vpop.permute.xlu0 %749
      %751 = vrot.lane.b32.xlu0 %v736, 16
      %v752 = vpop.permute.xlu0 %751
      %753 = vrot.lane.b32.xlu0 %v738, 16
      %v754 = vpop.permute.xlu0 %753
      %755 = vrot.lane.b32.xlu0 %v740, 16
      %v756 = vpop.permute.xlu0 %755
      %v757 = vsel %vm199, %v742, %v750
      %v758 = vsel %vm199, %v744, %v752
      %v759 = vsel %vm199, %v746, %v754
      %v760 = vsel %vm199, %v748, %v756
      %v761 = vsel %vm199, %v750, %v742
      %v762 = vsel %vm199, %v752, %v744
      %v763 = vsel %vm199, %v754, %v746
      %v764 = vsel %vm199, %v756, %v748
      %v765 = vsel %vm199, %v733, %v761
      %v766 = vsel %vm200, %v734, %v757
      %v767 = vsel %vm199, %v735, %v762
      %v768 = vsel %vm200, %v736, %v758
      %v769 = vsel %vm199, %v737, %v763
      %v770 = vsel %vm200, %v738, %v759
      %v771 = vsel %vm199, %v739, %v764
      %v772 = vsel %vm200, %v740, %v760
      %773 = vrot.lane.b32.xlu0 %v765, 1
      %v774 = vpop.permute.xlu0 %773
      %775 = vrot.lane.b32.xlu0 %v767, 1
      %v776 = vpop.permute.xlu0 %775
      %777 = vrot.lane.b32.xlu0 %v769, 1
      %v778 = vpop.permute.xlu0 %777
      %779 = vrot.lane.b32.xlu0 %v771, 1
      %v780 = vpop.permute.xlu0 %779
      %781 = vrot.lane.b32.xlu0 %v766, 1
      %v782 = vpop.permute.xlu0 %781
      %783 = vrot.lane.b32.xlu0 %v768, 1
      %v784 = vpop.permute.xlu0 %783
      %785 = vrot.lane.b32.xlu0 %v770, 1
      %v786 = vpop.permute.xlu0 %785
      %787 = vrot.lane.b32.xlu0 %v772, 1
      %v788 = vpop.permute.xlu0 %787
      %v789 = vsel %vm263, %v774, %v782
      %v790 = vsel %vm263, %v776, %v784
      %v791 = vsel %vm263, %v778, %v786
      %v792 = vsel %vm263, %v780, %v788
      %v793 = vsel %vm263, %v782, %v774
      %v794 = vsel %vm263, %v784, %v776
      %v795 = vsel %vm263, %v786, %v778
      %v796 = vsel %vm263, %v788, %v780
      %v797 = vsel %vm203, %v765, %v793
      %v798 = vsel %vm204, %v766, %v789
      %v799 = vsel %vm203, %v767, %v794
      %v800 = vsel %vm204, %v768, %v790
      %v801 = vsel %vm203, %v769, %v795
      %v802 = vsel %vm204, %v770, %v791
      %v803 = vsel %vm203, %v771, %v796
      %v804 = vsel %vm204, %v772, %v792
      %805 = vrot.lane.b32.xlu0 %v765, 127
      %v806 = vpop.permute.xlu0 %805
      %807 = vrot.lane.b32.xlu0 %v767, 127
      %v808 = vpop.permute.xlu0 %807
      %809 = vrot.lane.b32.xlu0 %v769, 127
      %v810 = vpop.permute.xlu0 %809
      %811 = vrot.lane.b32.xlu0 %v771, 127
      %v812 = vpop.permute.xlu0 %811
      %813 = vrot.lane.b32.xlu0 %v766, 127
      %v814 = vpop.permute.xlu0 %813
      %815 = vrot.lane.b32.xlu0 %v768, 127
      %v816 = vpop.permute.xlu0 %815
      %817 = vrot.lane.b32.xlu0 %v770, 127
      %v818 = vpop.permute.xlu0 %817
      %819 = vrot.lane.b32.xlu0 %v772, 127
      %v820 = vpop.permute.xlu0 %819
      %v821 = vsel %vm296, %v806, %v814
      %v822 = vsel %vm296, %v808, %v816
      %v823 = vsel %vm296, %v810, %v818
      %v824 = vsel %vm296, %v812, %v820
      %v825 = vsel %vm296, %v814, %v806
      %v826 = vsel %vm296, %v816, %v808
      %v827 = vsel %vm296, %v818, %v810
      %v828 = vsel %vm296, %v820, %v812
      %v829 = vsel %vm205, %v765, %v821
      %v830 = vsel %vm206, %v766, %v825
      %v831 = vsel %vm205, %v767, %v822
      %v832 = vsel %vm206, %v768, %v826
      %v833 = vsel %vm205, %v769, %v823
      %v834 = vsel %vm206, %v770, %v827
      %v835 = vsel %vm205, %v771, %v824
      %v836 = vsel %vm206, %v772, %v828
      %837 = vrot.lane.b32.xlu0 %v733, 1
      %v838 = vpop.permute.xlu0 %837
      %839 = vrot.lane.b32.xlu0 %v735, 1
      %v840 = vpop.permute.xlu0 %839
      %841 = vrot.lane.b32.xlu0 %v737, 1
      %v842 = vpop.permute.xlu0 %841
      %843 = vrot.lane.b32.xlu0 %v739, 1
      %v844 = vpop.permute.xlu0 %843
      %845 = vrot.lane.b32.xlu0 %v734, 1
      %v846 = vpop.permute.xlu0 %845
      %847 = vrot.lane.b32.xlu0 %v736, 1
      %v848 = vpop.permute.xlu0 %847
      %849 = vrot.lane.b32.xlu0 %v738, 1
      %v850 = vpop.permute.xlu0 %849
      %851 = vrot.lane.b32.xlu0 %v740, 1
      %v852 = vpop.permute.xlu0 %851
      %v853 = vsel %vm263, %v838, %v846
      %v854 = vsel %vm263, %v840, %v848
      %v855 = vsel %vm263, %v842, %v850
      %v856 = vsel %vm263, %v844, %v852
      %v857 = vsel %vm263, %v846, %v838
      %v858 = vsel %vm263, %v848, %v840
      %v859 = vsel %vm263, %v850, %v842
      %v860 = vsel %vm263, %v852, %v844
      %v861 = vsel %vm203, %v733, %v857
      %v862 = vsel %vm204, %v734, %v853
      %v863 = vsel %vm203, %v735, %v858
      %v864 = vsel %vm204, %v736, %v854
      %v865 = vsel %vm203, %v737, %v859
      %v866 = vsel %vm204, %v738, %v855
      %v867 = vsel %vm203, %v739, %v860
      %v868 = vsel %vm204, %v740, %v856
      %869 = vrot.lane.b32.xlu0 %v733, 127
      %v870 = vpop.permute.xlu0 %869
      %871 = vrot.lane.b32.xlu0 %v735, 127
      %v872 = vpop.permute.xlu0 %871
      %873 = vrot.lane.b32.xlu0 %v737, 127
      %v874 = vpop.permute.xlu0 %873
      %875 = vrot.lane.b32.xlu0 %v739, 127
      %v876 = vpop.permute.xlu0 %875
      %877 = vrot.lane.b32.xlu0 %v734, 127
      %v878 = vpop.permute.xlu0 %877
      %879 = vrot.lane.b32.xlu0 %v736, 127
      %v880 = vpop.permute.xlu0 %879
      %881 = vrot.lane.b32.xlu0 %v738, 127
      %v882 = vpop.permute.xlu0 %881
      %883 = vrot.lane.b32.xlu0 %v740, 127
      %v884 = vpop.permute.xlu0 %883
      %v885 = vsel %vm296, %v870, %v878
      %v886 = vsel %vm296, %v872, %v880
      %v887 = vsel %vm296, %v874, %v882
      %v888 = vsel %vm296, %v876, %v884
      %v889 = vsel %vm296, %v878, %v870
      %v890 = vsel %vm296, %v880, %v872
      %v891 = vsel %vm296, %v882, %v874
      %v892 = vsel %vm296, %v884, %v876
      %v893 = vsel %vm205, %v733, %v885
      %v894 = vsel %vm206, %v734, %v889
      %v895 = vsel %vm205, %v735, %v886
      %v896 = vsel %vm206, %v736, %v890
      %v897 = vsel %vm205, %v737, %v887
      %v898 = vsel %vm206, %v738, %v891
      %v899 = vsel %vm205, %v739, %v888
      %v900 = vsel %vm206, %v740, %v892
      %901 = vrot.lane.b32.xlu0 %v733, 112
      %v902 = vpop.permute.xlu0 %901
      %903 = vrot.lane.b32.xlu0 %v735, 112
      %v904 = vpop.permute.xlu0 %903
      %905 = vrot.lane.b32.xlu0 %v737, 112
      %v906 = vpop.permute.xlu0 %905
      %907 = vrot.lane.b32.xlu0 %v739, 112
      %v908 = vpop.permute.xlu0 %907
      %909 = vrot.lane.b32.xlu0 %v734, 112
      %v910 = vpop.permute.xlu0 %909
      %911 = vrot.lane.b32.xlu0 %v736, 112
      %v912 = vpop.permute.xlu0 %911
      %913 = vrot.lane.b32.xlu0 %v738, 112
      %v914 = vpop.permute.xlu0 %913
      %915 = vrot.lane.b32.xlu0 %v740, 112
      %v916 = vpop.permute.xlu0 %915
      %v917 = vsel %vm393, %v902, %v910
      %v918 = vsel %vm393, %v904, %v912
      %v919 = vsel %vm393, %v906, %v914
      %v920 = vsel %vm393, %v908, %v916
      %v921 = vsel %vm393, %v910, %v902
      %v922 = vsel %vm393, %v912, %v904
      %v923 = vsel %vm393, %v914, %v906
      %v924 = vsel %vm393, %v916, %v908
      %v925 = vsel %vm201, %v733, %v917
      %v926 = vsel %vm202, %v734, %v921
      %v927 = vsel %vm201, %v735, %v918
      %v928 = vsel %vm202, %v736, %v922
      %v929 = vsel %vm201, %v737, %v919
      %v930 = vsel %vm202, %v738, %v923
      %v931 = vsel %vm201, %v739, %v920
      %v932 = vsel %vm202, %v740, %v924
      %933 = vrot.lane.b32.xlu0 %v925, 1
      %v934 = vpop.permute.xlu0 %933
      %935 = vrot.lane.b32.xlu0 %v927, 1
      %v936 = vpop.permute.xlu0 %935
      %937 = vrot.lane.b32.xlu0 %v929, 1
      %v938 = vpop.permute.xlu0 %937
      %939 = vrot.lane.b32.xlu0 %v931, 1
      %v940 = vpop.permute.xlu0 %939
      %941 = vrot.lane.b32.xlu0 %v926, 1
      %v942 = vpop.permute.xlu0 %941
      %943 = vrot.lane.b32.xlu0 %v928, 1
      %v944 = vpop.permute.xlu0 %943
      %945 = vrot.lane.b32.xlu0 %v930, 1
      %v946 = vpop.permute.xlu0 %945
      %947 = vrot.lane.b32.xlu0 %v932, 1
      %v948 = vpop.permute.xlu0 %947
      %v949 = vsel %vm263, %v934, %v942
      %v950 = vsel %vm263, %v936, %v944
      %v951 = vsel %vm263, %v938, %v946
      %v952 = vsel %vm263, %v940, %v948
      %v953 = vsel %vm263, %v942, %v934
      %v954 = vsel %vm263, %v944, %v936
      %v955 = vsel %vm263, %v946, %v938
      %v956 = vsel %vm263, %v948, %v940
      %v957 = vsel %vm203, %v925, %v953
      %v958 = vsel %vm204, %v926, %v949
      %v959 = vsel %vm203, %v927, %v954
      %v960 = vsel %vm204, %v928, %v950
      %v961 = vsel %vm203, %v929, %v955
      %v962 = vsel %vm204, %v930, %v951
      %v963 = vsel %vm203, %v931, %v956
      %v964 = vsel %vm204, %v932, %v952
      %965 = vrot.lane.b32.xlu0 %v925, 127
      %v966 = vpop.permute.xlu0 %965
      %967 = vrot.lane.b32.xlu0 %v927, 127
      %v968 = vpop.permute.xlu0 %967
      %969 = vrot.lane.b32.xlu0 %v929, 127
      %v970 = vpop.permute.xlu0 %969
      %971 = vrot.lane.b32.xlu0 %v931, 127
      %v972 = vpop.permute.xlu0 %971
      %973 = vrot.lane.b32.xlu0 %v926, 127
      %v974 = vpop.permute.xlu0 %973
      %975 = vrot.lane.b32.xlu0 %v928, 127
      %v976 = vpop.permute.xlu0 %975
      %977 = vrot.lane.b32.xlu0 %v930, 127
      %v978 = vpop.permute.xlu0 %977
      %979 = vrot.lane.b32.xlu0 %v932, 127
      %v980 = vpop.permute.xlu0 %979
      %v981 = vsel %vm296, %v966, %v974
      %v982 = vsel %vm296, %v968, %v976
      %v983 = vsel %vm296, %v970, %v978
      %v984 = vsel %vm296, %v972, %v980
      %v985 = vsel %vm296, %v974, %v966
      %v986 = vsel %vm296, %v976, %v968
      %v987 = vsel %vm296, %v978, %v970
      %v988 = vsel %vm296, %v980, %v972
      %v989 = vsel %vm205, %v925, %v981
      %v990 = vsel %vm206, %v926, %v985
      %v991 = vsel %vm205, %v927, %v982
      %v992 = vsel %vm206, %v928, %v986
      %v993 = vsel %vm205, %v929, %v983
      %v994 = vsel %vm206, %v930, %v987
      %v995 = vsel %vm205, %v931, %v984
      %v996 = vsel %vm206, %v932, %v988
      %v997 = vpack.c.bf16 %v799, %v797
      %v998 = vpack.c.bf16 %v800, %v798
      %v999 = vpack.c.bf16 %v803, %v801
      %v1000 = vpack.c.bf16 %v804, %v802
      %v1001 = vpack.c.bf16 %v767, %v765
      %v1002 = vpack.c.bf16 %v768, %v766
      %v1003 = vpack.c.bf16 %v771, %v769
      %v1004 = vpack.c.bf16 %v772, %v770
      %v1005 = vpack.c.bf16 %v831, %v829
      %v1006 = vpack.c.bf16 %v832, %v830
      %v1007 = vpack.c.bf16 %v835, %v833
      %v1008 = vpack.c.bf16 %v836, %v834
      %v1009 = vpack.c.bf16 %v863, %v861
      %v1010 = vpack.c.bf16 %v864, %v862
      %v1011 = vpack.c.bf16 %v867, %v865
      %v1012 = vpack.c.bf16 %v868, %v866
      %v1013 = vpack.c.bf16 %v735, %v733
      %v1014 = vpack.c.bf16 %v736, %v734
      %v1015 = vpack.c.bf16 %v739, %v737
      %v1016 = vpack.c.bf16 %v740, %v738
      %v1017 = vpack.c.bf16 %v895, %v893
      %v1018 = vpack.c.bf16 %v896, %v894
      %v1019 = vpack.c.bf16 %v899, %v897
      %v1020 = vpack.c.bf16 %v900, %v898
      %v1021 = vpack.c.bf16 %v959, %v957
      %v1022 = vpack.c.bf16 %v960, %v958
      %v1023 = vpack.c.bf16 %v963, %v961
      %v1024 = vpack.c.bf16 %v964, %v962
      %v1025 = vpack.c.bf16 %v927, %v925
      %v1026 = vpack.c.bf16 %v928, %v926
      %v1027 = vpack.c.bf16 %v931, %v929
      %v1028 = vpack.c.bf16 %v932, %v930
      %v1029 = vpack.c.bf16 %v991, %v989
      %v1030 = vpack.c.bf16 %v992, %v990
      %v1031 = vpack.c.bf16 %v995, %v993
      %v1032 = vpack.c.bf16 %v996, %v994
      %v1033 = vld [vmem:[%s2] sm:$0xff]
      %v1034 = vld [vmem:[%s2 + $0x8] sm:$0xf]
      %v1035 = vld [vmem:[%s2 + $0xc] sm:$0xff]
      %v1036 = vld [vmem:[%s2 + $0x14] sm:$0xf]
      %v1037 = vld [vmem:[%s2 + $0x18] sm:$0xff]
      %v1038 = vld [vmem:[%s2 + $0x20] sm:$0xf]
      %v1039 = vld [vmem:[%s2 + $0x24] sm:$0xff]
      %v1040 = vld [vmem:[%s2 + $0x2c] sm:$0xf]
      %v1049 = vunpack.c.l.b16 %v1033
      %v1050 = vunpack.c.h.b16 %v1033
      %v1051 = vunpack.c.l.b16 %v1034
      %v1052 = vunpack.c.l.b16 %v1035
      %v1053 = vunpack.c.h.b16 %v1035
      %v1054 = vunpack.c.l.b16 %v1036
      %v1055 = vunpack.c.l.b16 %v1037
      %v1056 = vunpack.c.h.b16 %v1037
      %v1057 = vunpack.c.l.b16 %v1038
      %v1058 = vunpack.c.l.b16 %v1039
      %v1059 = vunpack.c.h.b16 %v1039
      %v1060 = vunpack.c.l.b16 %v1040
      %v1061 = vpack.c.b16 %v1052, %v1049
      %v1062 = vpack.c.b16 %v1053, %v1050
      %v1063 = vpack.c.b16 %v1054, %v1051
      %v1064 = vpack.c.b16 %v1058, %v1055
      %v1065 = vpack.c.b16 %v1059, %v1056
      %v1066 = vpack.c.b16 %v1060, %v1057
      %v1072 = vsel %vm548, %v1063, 0
      %v1075 = vsel %vm548, %v1066, 0
      %1077 = vmatprep.subr.bf16.mxu0 %v998
      %1078 = vmatpush1.bf16.msra.mxu0 %v997
      %1079 = vmatprep.subr.bf16.mxu0 %v1000
      %1080 = vmatpush1.bf16.msra.mxu0 %v999
      %1081 = vmatprep.subr.bf16.mxu0 %v1002
      %1082 = vmatpush1.bf16.msra.mxu0 %v1001
      %1083 = vmatprep.subr.bf16.mxu0 %v1004
      %1084 = vmatpush1.bf16.msra.mxu0 %v1003
      %1085 = vmatprep.subr.bf16.mxu0 %v1006
      %1086 = vmatpush1.bf16.msra.mxu0 %v1005
      %1087 = vmatprep.subr.bf16.mxu0 %v1008
      %1088 = vmatpush1.bf16.msra.mxu0 %v1007
      %1089 = vmatprep.subr.bf16.mxu0 %v1010
      %1090 = vmatpush1.bf16.msra.mxu0 %v1009
      %1091 = vmatprep.subr.bf16.mxu0 %v1012
      %1092 = vmatpush1.bf16.msra.mxu0 %v1011
      %1093 = vmatprep.subr.bf16.mxu0 %v1014
      %1094 = vmatpush1.bf16.msra.mxu0 %v1013
      %1095 = vmatprep.subr.bf16.mxu0 %v1016
      %1096 = vmatpush1.bf16.msra.mxu0 %v1015
      %1097 = vmatprep.subr.bf16.mxu0 %v1018
      %1098 = vmatpush1.bf16.msra.mxu0 %v1017
      %1099 = vmatprep.subr.bf16.mxu0 %v1020
      %1100 = vmatpush1.bf16.msra.mxu0 %v1019
      %1101 = vmatprep.subr.bf16.mxu0 %v1022
      %1102 = vmatpush1.bf16.msra.mxu0 %v1021
      %1103 = vmatprep.subr.bf16.mxu0 %v1024
      %1104 = vmatpush1.bf16.msra.mxu0 %v1023
      %1105 = vmatprep.subr.bf16.mxu0 %v1026
      %1106 = vmatpush1.bf16.msra.mxu0 %v1025
      %1107 = vmatprep.subr.bf16.mxu0 %v1028
      %1108 = vmatpush1.bf16.msra.mxu0 %v1027
      %1109 = vmatprep.mubr.bf16.mxu0 %v1062
      %1110 = vmatmul.mubr.bf16.gmra.mrb[0].mxu0 %v1061
      %v1111 = vpop.f32.mrb[0].mxu0
      %v1112 = vadd.f32 0.0, %v1111
      %v1113 = vpop.f32.mrb[0].mxu0
      %v1114 = vadd.f32 0.0, %v1113
      %v1115 = vpop.f32.mrb[0].mxu0
      %v1116 = vadd.f32 0.0, %v1115
      %v1117 = vpop.f32.mrb[0].mxu0
      %v1118 = vadd.f32 0.0, %v1117
      %1119 = vmatprep.mubr.bf16.mxu0 %v1065
      %1120 = vmatmul.mubr.bf16.gmra.mrb[0].mxu0 %v1064
      %v1121 = vpop.f32.mrb[0].mxu0
      %v1122 = vadd.f32 0.0, %v1121
      %v1123 = vpop.f32.mrb[0].mxu0
      %v1124 = vadd.f32 0.0, %v1123
      %v1125 = vpop.f32.mrb[0].mxu0
      %v1126 = vadd.f32 0.0, %v1125
      %v1127 = vpop.f32.mrb[0].mxu0
      %v1128 = vadd.f32 0.0, %v1127
      %1129 = vdwg.mxu0
      %1130 = vmatprep.subr.bf16.mxu0 %v1030
      %1131 = vmatpush1.bf16.msra.mxu0 %v1029
      %1132 = vmatprep.subr.bf16.mxu0 %v1032
      %1133 = vmatpush1.bf16.msra.mxu0 %v1031
      %1134 = vmatprep.subr.bf16.mxu0 0
      %1135 = vmatpush1.bf16.msra.mxu0 0
      %1136 = vmatprep.subr.bf16.mxu0 0
      %1137 = vmatpush1.bf16.msra.mxu0 0
      %1138 = vmatprep.subr.bf16.mxu0 0
      %1139 = vmatpush1.bf16.msra.mxu0 0
      %1140 = vmatprep.subr.bf16.mxu0 0
      %1141 = vmatpush1.bf16.msra.mxu0 0
      %1142 = vmatprep.subr.bf16.mxu0 0
      %1143 = vmatpush1.bf16.msra.mxu0 0
      %1144 = vmatprep.subr.bf16.mxu0 0
      %1145 = vmatpush1.bf16.msra.mxu0 0
      %1146 = vmatprep.subr.bf16.mxu0 0
      %1147 = vmatpush1.bf16.msra.mxu0 0
      %1148 = vmatprep.subr.bf16.mxu0 0
      %1149 = vmatpush1.bf16.msra.mxu0 0
      %1150 = vmatprep.subr.bf16.mxu0 0
      %1151 = vmatpush1.bf16.msra.mxu0 0
      %1152 = vmatprep.subr.bf16.mxu0 0
      %1153 = vmatpush1.bf16.msra.mxu0 0
      %1154 = vmatprep.subr.bf16.mxu0 0
      %1155 = vmatpush1.bf16.msra.mxu0 0
      %1156 = vmatprep.subr.bf16.mxu0 0
      %1157 = vmatpush1.bf16.msra.mxu0 0
      %1158 = vmatprep.subr.bf16.mxu0 0
      %1159 = vmatpush1.bf16.msra.mxu0 0
      %1160 = vmatprep.subr.bf16.mxu0 0
      %1161 = vmatpush1.bf16.msra.mxu0 0
      %1162 = vmatprep.mubr.bf16.mxu0 0
      %1163 = vmatmul.mubr.bf16.gmra.mrb[0].mxu0 %v1072
      %v1164 = vpop.f32.mrb[0].mxu0
      %v1165 = vadd.f32 %v1112, %v1164
      %v1166 = vpop.f32.mrb[0].mxu0
      %v1167 = vadd.f32 %v1114, %v1166
      %v1168 = vpop.f32.mrb[0].mxu0
      %v1169 = vadd.f32 %v1116, %v1168
      %v1170 = vpop.f32.mrb[0].mxu0
      %v1171 = vadd.f32 %v1118, %v1170
      %1172 = vmatprep.mubr.bf16.mxu0 0
      %1173 = vmatmul.mubr.bf16.gmra.mrb[0].mxu0 %v1075
      %v1174 = vpop.f32.mrb[0].mxu0
      %v1175 = vadd.f32 %v1122, %v1174
      %v1176 = vpop.f32.mrb[0].mxu0
      %v1177 = vadd.f32 %v1124, %v1176
      %v1178 = vpop.f32.mrb[0].mxu0
      %v1179 = vadd.f32 %v1126, %v1178
      %v1180 = vpop.f32.mrb[0].mxu0
      %v1181 = vadd.f32 %v1128, %v1180
      %1182 = vdwg.mxu0
      %v1183 = vadd.f32 %v1165, %v1167
      %1184 = vadd.xlane.f32.xlu0 %v1183
      %v1185 = vpop.xlane.xlu0 %1184
      %v1186 = vadd.f32 %v1169, %v1171
      %1187 = vadd.xlane.f32.xlu0 %v1186
      %v1188 = vpop.xlane.xlu0 %1187
      %v1189 = vadd.f32 %v1175, %v1177
      %1190 = vadd.xlane.f32.xlu0 %v1189
      %v1191 = vpop.xlane.xlu0 %1190
      %v1192 = vadd.f32 %v1179, %v1181
      %1193 = vadd.xlane.f32.xlu0 %v1192
      %v1194 = vpop.xlane.xlu0 %1193
      %v1195 = vmul.f32 %v1165, %v1165
      %v1196 = vmul.f32 %v1167, %v1167
      %v1197 = vmul.f32 %v1169, %v1169
      %v1198 = vmul.f32 %v1171, %v1171
      %v1199 = vmul.f32 %v1175, %v1175
      %v1200 = vmul.f32 %v1177, %v1177
      %v1201 = vmul.f32 %v1179, %v1179
      %v1202 = vmul.f32 %v1181, %v1181
      %v1203 = vadd.f32 %v1195, %v1196
      %1204 = vadd.xlane.f32.xlu0 %v1203
      %v1205 = vpop.xlane.xlu0 %1204
      %v1206 = vadd.f32 %v1197, %v1198
      %1207 = vadd.xlane.f32.xlu0 %v1206
      %v1208 = vpop.xlane.xlu0 %1207
      %v1209 = vadd.f32 %v1199, %v1200
      %1210 = vadd.xlane.f32.xlu0 %v1209
      %v1211 = vpop.xlane.xlu0 %1210
      %v1212 = vadd.f32 %v1201, %v1202
      %1213 = vadd.xlane.f32.xlu0 %v1212
      %v1214 = vpop.xlane.xlu0 %1213
      %v1215 = vmul.f32 %v1185, 0.00390625
      %v1216 = vmul.f32 %v1188, 0.00390625
      %v1217 = vmul.f32 %v1191, 0.00390625
      %v1218 = vmul.f32 %v1194, 0.00390625
      %v1219 = vmul.f32 %v1205, 0.00390625
      %v1220 = vmul.f32 %v1208, 0.00390625
      %v1221 = vmul.f32 %v1211, 0.00390625
      %v1222 = vmul.f32 %v1214, 0.00390625
      %v1223 = vmul.f32 %v1215, %v1215
      %v1224 = vmul.f32 %v1216, %v1216
      %v1225 = vmul.f32 %v1217, %v1217
      %v1226 = vmul.f32 %v1218, %v1218
      %v1227 = vsub.f32 %v1219, %v1223
      %v1228 = vsub.f32 %v1220, %v1224
      %v1229 = vsub.f32 %v1221, %v1225
      %v1230 = vsub.f32 %v1222, %v1226
      %v1231 = vsub.f32 %v1165, %v1215
      %v1232 = vsub.f32 %v1167, %v1215
      %v1233 = vsub.f32 %v1169, %v1216
      %v1234 = vsub.f32 %v1171, %v1216
      %v1235 = vsub.f32 %v1175, %v1217
      %v1236 = vsub.f32 %v1177, %v1217
      %v1237 = vsub.f32 %v1179, %v1218
      %v1238 = vsub.f32 %v1181, %v1218
      %v1239 = vadd.f32 %v1227, 1e-05
      %v1240 = vadd.f32 %v1228, 1e-05
      %v1241 = vadd.f32 %v1229, 1e-05
      %v1242 = vadd.f32 %v1230, 1e-05
      %v1243 = vrsqrt.pop %v1239
      %v1244 = vrsqrt.pop %v1240
      %v1245 = vrsqrt.pop %v1241
      %v1246 = vrsqrt.pop %v1242
      %v1247 = vmul.f32 %v1231, %v1243
      %v1248 = vmul.f32 %v1232, %v1243
      %v1249 = vmul.f32 %v1233, %v1244
      %v1250 = vmul.f32 %v1234, %v1244
      %v1251 = vmul.f32 %v1235, %v1245
      %v1252 = vmul.f32 %v1236, %v1245
      %v1253 = vmul.f32 %v1237, %v1246
      %v1254 = vmul.f32 %v1238, %v1246
      %v1255 = vadd.f32 %v207, %v1247
      %v1256 = vadd.f32 %v208, %v1248
      %v1257 = vadd.f32 %v209, %v1249
      %v1258 = vadd.f32 %v210, %v1250
      %v1259 = vadd.f32 %v211, %v1251
      %v1260 = vadd.f32 %v212, %v1252
      %v1261 = vadd.f32 %v213, %v1253
      %v1262 = vadd.f32 %v214, %v1254
      %1263 = vst [vmem:[%s170] sm:$0xff] %v1255
      %1264 = vst [vmem:[%s170 + $0x8] sm:$0xff] %v1256
      %1265 = vst [vmem:[%s170 + $0x10] sm:$0xff] %v1257
      %1266 = vst [vmem:[%s170 + $0x18] sm:$0xff] %v1258
      %1267 = vst [vmem:[%s170 + $0x20] sm:$0xff] %v1259
      %1268 = vst [vmem:[%s170 + $0x28] sm:$0xff] %v1260
      %1269 = vst [vmem:[%s170 + $0x30] sm:$0xff] %v1261
      %1270 = vst [vmem:[%s170 + $0x38] sm:$0xff] %v1262
      %p1271 = scmp.lt.s32.totalorder %s14, 1
      %s1272 = scalar_select %p1271, %s14, 1
      %s1273 = smul.addr %s1272, 8
      %s1274 = smul.addr %s1273, 8
      %s1275 = scalar_lea.vmem %s3, %s1274
      // Predicated region
      $region33: #{resnet_block_forward.1} parent=31 // pred_check
        %p1276 = pneg %p100
      $region34: #{resnet_block_forward.1} parent=31 // pred_check_branch
        %1278 = sbr.rel (%p1276) target = $region36
      $region35: #{resnet_block_forward.1} parent=31 // pred_region
        _
      $region36: #{resnet_block_forward.1} parent=31 // pred_fallthru
        _
    $region32: #{resnet_block_forward.1} parent=5 // pred_fallthru
      _
    %p1279 = scmp.le.s32.totalorder 2, %s9
    // Predicated region
    $region37: #{resnet_block_forward.1} parent=5 // pred_check
      %p1280 = pneg %p1279
    $region38: #{resnet_block_forward.1} parent=5 // pred_check_branch
      %1282 = sbr.rel (%p1280) target = $region40
    $region39: #{resnet_block_forward.1} parent=5 // pred_region
      %s1283 = ssub.s32 %s9, 2
      // Predicated region
      $region41: #{resnet_block_forward.1} parent=39 // pred_check
        %p1284 = pneg %p106
      $region42: #{resnet_block_forward.1} parent=39 // pred_check_branch
        %1286 = sbr.rel (%p1284) target = $region44
      $region43: #{resnet_block_forward.1} parent=39 // pred_region
        %p1287 = scmp.lt.s32.totalorder %s15, 1
        %s1288 = scalar_select %p1287, %s15, 1
        %s1289 = smul.addr %s1288, 8
        %s1290 = smul.addr %s1289, 8
        %s1291 = scalar_lea.vmem %s3, %s1290
      $region44: #{resnet_block_forward.1} parent=39 // pred_fallthru
        _
    $region40: #{resnet_block_forward.1} parent=5 // pred_fallthru
      _
  $region6: #{resnet_block_forward.1} parent=0 // loop_footer
    %s13 = sadd.s32 1, %s9
  $region7: #{resnet_block_forward.1} parent=0 // loop_footer_branch
    %8 = sbr.rel target = $region3
  $region8: #{resnet_block_forward.1} parent=0 // loop_exit
    _

</llo_original>
